<compile_context>
chip_gen: v5e
topology: v5e:2x2
jax: 0.10.0
libtpu: 0.0.40
codegen_flags: <defaults>
</compile_context>

<pallas_src>
import jax
import jax.numpy as jnp
from jax.experimental import pallas as pl
from jax.experimental.pallas import tpu as pltpu


def se_kernel(x_ref, w1_ref, w2_ref, o_ref):
    # x_ref: (Bt, C, HW), w1_ref: (C_red, C), w2_ref: (C, C_red), o_ref: (Bt, C, HW)
    x = x_ref[...]                                   # keep in input dtype
    w1 = w1_ref[...].astype(jnp.float32)             # (C_red, C)
    w2 = w2_ref[...].astype(jnp.float32)             # (C, C_red)

    # squeeze: global average pool over the spatial dim, f32 accumulation
    pooled = jnp.mean(x, axis=-1, dtype=jnp.float32)             # (Bt, C)

    # excitation on the VPU/XLU (FLOPs are negligible; avoid MXU push/pop latency)
    # fc1: (Bt, C) . (C_red, C)^T -> (Bt, C_red), then ReLU
    h = jnp.sum(pooled[:, None, :] * w1[None, :, :], axis=-1)    # (Bt, C_red)
    h = jnp.maximum(h, 0.0)
    # fc2: (Bt, C_red) . (C, C_red)^T -> (Bt, C), then sigmoid
    y = jnp.sum(h[:, None, :] * w2[None, :, :], axis=-1)         # (Bt, C)
    y = jax.nn.sigmoid(y)

    # scale: broadcast (Bt, C, 1) over spatial; multiply in the input dtype
    o_ref[...] = (x * y.astype(x.dtype)[:, :, None]).astype(o_ref.dtype)


def se_layer(x, w1, w2):
    """x: (B, C, H, W) NCHW; w1: (C//r, C); w2: (C, C//r).  No biases."""
    B, C, H, W = x.shape
    HW = H * W
    C_red = w1.shape[0]
    x_flat = x.reshape(B, C, HW)

    itemsize = x.dtype.itemsize
    bytes_per_batch = C * HW * itemsize

    # ---- batch tile selection: aim for ~2 MiB blocks, but keep >= 2 grid
    # steps when B >= 2 so a v7x chip can shard the grid across its 2 TCs.
    target_block_bytes = 2 * 1024 * 1024
    bt = max(1, min(B, target_block_bytes // max(bytes_per_batch, 1)))
    if B >= 2:
        bt = min(bt, max(1, B // 2))
    while B % bt != 0:          # keep the grid exact (tiny search, B is small)
        bt -= 1
    grid = (B // bt,)

    # ---- VMEM budget: double-buffered in + out blocks plus resident weights.
    # Cap below ~48 MiB so the same tiling stays safe on v7x (64 MiB VMEM).
    block_bytes = bt * C * HW * itemsize
    weight_bytes = (C_red * C + C * C_red) * w1.dtype.itemsize
    needed = 2 * 2 * block_bytes + 2 * weight_bytes
    vmem_limit = int(min(max(needed + (4 << 20), 32 << 20), 48 << 20))

    # ---- advisory cost estimate so XLA schedules/overlaps this mem-bound call
    cost = pl.CostEstimate(
        flops=int(B * (2 * C * C_red * 2 + 2 * C * HW)),
        transcendentals=int(B * C),
        bytes_accessed=int(2 * B * C * HW * itemsize + 2 * weight_bytes),
    )

    out_flat = pl.pallas_call(
        se_kernel,
        out_shape=jax.ShapeDtypeStruct((B, C, HW), x.dtype),
        grid_spec=pltpu.PrefetchScalarGridSpec(
            num_scalar_prefetch=0,
            grid=grid,
            in_specs=[
                pl.BlockSpec((bt, C, HW), lambda b: (b, 0, 0)),
                pl.BlockSpec((C_red, C), lambda b: (0, 0)),
                pl.BlockSpec((C, C_red), lambda b: (0, 0)),
            ],
            out_specs=pl.BlockSpec((bt, C, HW), lambda b: (b, 0, 0)),
        ),
        compiler_params=pltpu.CompilerParams(
            dimension_semantics=("parallel",),
            vmem_limit_bytes=vmem_limit,
        ),
        cost_estimate=cost,
    )(x_flat, w1, w2)

    return out_flat.reshape(B, C, H, W)


def reference_se(x, w1, w2):
    pooled = jnp.mean(x.astype(jnp.float32), axis=(2, 3))          # (B, C)
    h = jnp.maximum(pooled @ w1.T, 0.0)                            # (B, C//r)
    y = jax.nn.sigmoid(h @ w2.T)                                   # (B, C)
    return (x.astype(jnp.float32) * y[:, :, None, None]).astype(x.dtype)


if __name__ == "__main__":
    B, C, H, W = 2, 64, 16, 16
    reduction = 16
    C_red = C // reduction

    key = jax.random.PRNGKey(0)
    kx, k1, k2 = jax.random.split(key, 3)

    x = jax.random.normal(kx, (B, C, H, W), dtype=jnp.float32)
    # deterministic synthetic weights (nn.Linear(out, in) layout, no bias)
    w1 = jax.random.normal(k1, (C_red, C), dtype=jnp.float32) * (1.0 / jnp.sqrt(C))
    w2 = jax.random.normal(k2, (C, C_red), dtype=jnp.float32) * (1.0 / jnp.sqrt(C_red))

    out = se_layer(x, w1, w2)
    jax.block_until_ready(out)

    ref = reference_se(x, w1, w2)
    assert out.shape == (B, C, H, W)
    assert jnp.allclose(out, ref, atol=1e-4, rtol=1e-4), "mismatch vs reference"

    print("KERNEL_OK")
</pallas_src>

<mosaic_0001>
module attributes {stable_mosaic.version = 11 : i64} {
  func.func @se_kernel(%arg0: i32, %arg1: memref<1x64x256xf32, #tpu.memory_space<vmem>>, %arg2: memref<4x64xf32, #tpu.memory_space<vmem>>, %arg3: memref<64x4xf32, #tpu.memory_space<vmem>>, %arg4: memref<1x64x256xf32, #tpu.memory_space<vmem>>) attributes {dimension_semantics = [#tpu.dimension_semantics<parallel>], iteration_bounds = array<i64: 2>, scalar_prefetch = 0 : i64, scratch_operands = 0 : i64, tpu.core_type = #tpu.core_type<tc>, window_params = [{transform_indices = @transform_0, window_bounds = array<i64: 1, 64, 256>}, {pipeline_mode = #tpu.pipeline_mode<synchronous>, transform_indices = @transform_1, window_bounds = array<i64: 4, 64>}, {pipeline_mode = #tpu.pipeline_mode<synchronous>, transform_indices = @transform_2, window_bounds = array<i64: 64, 4>}, {transform_indices = @transform_3, window_bounds = array<i64: 1, 64, 256>}]} {
    %c0 = arith.constant 0 : index
    %c0_0 = arith.constant 0 : index
    %c0_1 = arith.constant 0 : index
    %0 = vector.load %arg1[%c0, %c0_0, %c0_1] : memref<1x64x256xf32, #tpu.memory_space<vmem>>, vector<1x64x256xf32>
    %c0_2 = arith.constant 0 : index
    %c0_3 = arith.constant 0 : index
    %1 = vector.load %arg2[%c0_2, %c0_3] : memref<4x64xf32, #tpu.memory_space<vmem>>, vector<4x64xf32>
    %c0_4 = arith.constant 0 : index
    %c0_5 = arith.constant 0 : index
    %2 = vector.load %arg3[%c0_4, %c0_5] : memref<64x4xf32, #tpu.memory_space<vmem>>, vector<64x4xf32>
    %cst = arith.constant dense<0.000000e+00> : vector<1x64xf32>
    %3 = vector.multi_reduction <add>, %0, %cst [2] : vector<1x64x256xf32> to vector<1x64xf32>
    %cst_6 = arith.constant 2.560000e+02 : f32
    %4 = vector.broadcast %cst_6 : f32 to vector<1x64xf32>
    %5 = arith.divf %3, %4 : vector<1x64xf32>
    %6 = vector.shape_cast %5 : vector<1x64xf32> to vector<1x1x64xf32>
    %7 = vector.shape_cast %1 : vector<4x64xf32> to vector<1x4x64xf32>
    %8 = vector.broadcast %6 : vector<1x1x64xf32> to vector<1x4x64xf32>
    %9 = arith.mulf %8, %7 : vector<1x4x64xf32>
    %cst_7 = arith.constant dense<0.000000e+00> : vector<1x4xf32>
    %10 = vector.multi_reduction <add>, %9, %cst_7 [2] : vector<1x4x64xf32> to vector<1x4xf32>
    %cst_8 = arith.constant 0.000000e+00 : f32
    %11 = vector.broadcast %cst_8 : f32 to vector<1x4xf32>
    %12 = arith.maximumf %10, %11 : vector<1x4xf32>
    %13 = vector.shape_cast %12 : vector<1x4xf32> to vector<1x1x4xf32>
    %14 = vector.shape_cast %2 : vector<64x4xf32> to vector<1x64x4xf32>
    %15 = vector.broadcast %13 : vector<1x1x4xf32> to vector<1x64x4xf32>
    %16 = arith.mulf %15, %14 : vector<1x64x4xf32>
    %cst_9 = arith.constant dense<0.000000e+00> : vector<1x64xf32>
    %17 = vector.multi_reduction <add>, %16, %cst_9 [2] : vector<1x64x4xf32> to vector<1x64xf32>
    %18 = arith.negf %17 : vector<1x64xf32>
    %19 = math.exp %18 : vector<1x64xf32>
    %cst_10 = arith.constant 1.000000e+00 : f32
    %20 = vector.broadcast %cst_10 : f32 to vector<1x64xf32>
    %21 = arith.addf %20, %19 : vector<1x64xf32>
    %22 = arith.divf %20, %21 : vector<1x64xf32>
    %23 = vector.shape_cast %22 : vector<1x64xf32> to vector<1x64x1xf32>
    %24 = vector.broadcast %23 : vector<1x64x1xf32> to vector<1x64x256xf32>
    %25 = arith.mulf %0, %24 : vector<1x64x256xf32>
    %c0_11 = arith.constant 0 : index
    %c0_12 = arith.constant 0 : index
    %c0_13 = arith.constant 0 : index
    %26 = vector.load %arg4[%c0_11, %c0_12, %c0_13] : memref<1x64x256xf32, #tpu.memory_space<vmem>>, vector<1x64x256xf32>
    tpu.vector_store %arg4[%c0_11, %c0_12, %c0_13], %25 {strides = array<i32>} : memref<1x64x256xf32, #tpu.memory_space<vmem>>, vector<1x64x256xf32>,
    return
  }
  func.func @transform_0(%arg0: i32) -> (i32, i32, i32) {
    %c0_i32 = arith.constant 0 : i32
    %c0_i32_0 = arith.constant 0 : i32
    %c0_i32_1 = arith.constant 0 : i32
    return %arg0, %c0_i32, %c0_i32_0 : i32, i32, i32
  }
  func.func @transform_1(%arg0: i32) -> (i32, i32) {
    %c0_i32 = arith.constant 0 : i32
    %c0_i32_0 = arith.constant 0 : i32
    %c0_i32_1 = arith.constant 0 : i32
    return %c0_i32, %c0_i32_0 : i32, i32
  }
  func.func @transform_2(%arg0: i32) -> (i32, i32) {
    %c0_i32 = arith.constant 0 : i32
    %c0_i32_0 = arith.constant 0 : i32
    %c0_i32_1 = arith.constant 0 : i32
    return %c0_i32, %c0_i32_0 : i32, i32
  }
  func.func @transform_3(%arg0: i32) -> (i32, i32, i32) {
    %c0_i32 = arith.constant 0 : i32
    %c0_i32_0 = arith.constant 0 : i32
    %c0_i32_1 = arith.constant 0 : i32
    return %arg0, %c0_i32, %c0_i32_0 : i32, i32, i32
  }
}

</mosaic_0001>

<llo_original>
// kernel: tpu_custom_call.1
$region0: #{tpu_custom_call.1}
  #allocation0 [shape = 'u32[]', space=smem, size = 0x4, offset = 0x4, fixed_abs, tag = 'smem constant byte address 0x4 - core index']
  #allocation1 [shape = 'u32[72,128]{1,0:T(1,128)}', space=vmem, size = 0x9000, scoped, tag = 'internal scratch']
  %s0 = inlined_call_operand.hbm [shape: f32[2,64,256], index: 0, kind: input, shape index: {}]
  %s1 = inlined_call_operand.vmem [shape: f32[4,64], index: 1, kind: input, shape index: {}]
  %s2 = inlined_call_operand.vmem [shape: f32[64,4], index: 2, kind: input, shape index: {}]
  %s3 = inlined_call_operand.hbm [shape: f32[2,64,256], index: 3, kind: output, shape index: {}]
  %s4 = sld [smem:[#allocation0]]
  $region49: #{tpu_custom_call.1} parent=0
    _
  %s6 = ssub.s32 1, %s4
  %s7 = scalar_select 0, %s6, %s4
  $region1: #{tpu_custom_call.1} parent=0
    #allocation2 [shape = 'u8[131072]{0}', space=vmem, size = 0x20000, scoped, tag = 'input window, operand 0']
    #allocation3 [shape = 's32[2]{0}', space=sflag, size = 0x8, scoped, tag = 'scoped memory for tpu_custom_call.1']
    #allocation4 [shape = 's32[2]{0}', space=sflag, size = 0x8, scoped, tag = 'scoped memory for tpu_custom_call.1']
    #allocation5 [shape = 'u8[131072]{0}', space=vmem, size = 0x20000, scoped, tag = 'output window, operand 0']
    %8 = vsyncpa [#allocation3], 0
    %s9 = scalar_lea.sflag [#allocation3], 1
    %10 = vsyncpa %s9, 0
    %11 = vsyncpa [#allocation4], 0
    %s12 = scalar_lea.sflag [#allocation4], 1
    %13 = vsyncpa %s12, 0
    loop: start=0, step=1, limit=4
    $region2: #{tpu_custom_call.1} parent=1 // loop_pre_header
      _
    $region3: #{tpu_custom_call.1} parent=1 // loop_header
      %s15 = sphi 0, %s19
      %p16 = scmp.ge.s32.totalorder %s15, 4
      %s25 = sphi 0, %s27
      %s28 = sphi 0, %s25
      %s29 = sphi 0, %s28
      %s45 = sphi 0, %s29
      %s49 = sphi 0, %s49
      %s51 = sphi 0, %s49
      %s52 = sphi 0, %s51
      %s66 = sphi 0, %s52
      %s70 = sphi 0, %s70
      %s72 = sphi 0, %s70
      %s73 = sphi 0, %s72
      %s87 = sphi 0, %s73
      %s93 = sphi 0, %s95
      %s96 = sphi 0, %s93
      %s97 = sphi 0, %s96
      %s113 = sphi 0, %s97
    $region4: #{tpu_custom_call.1} parent=1 // loop_header_branch
      %18 = sbr.rel (%p16) target = $region8
    $region5: #{tpu_custom_call.1} parent=1 // loop_body
      %s20 = ssub.s32 %s15, 1
      %s21 = ssub.s32 %s15, 2
      %s22 = sadd.s32 %s15, 1
      %s23 = ssub.s32 %s15, %s22
      %p24 = scmp.eq.s32.totalorder %s23, 0
      %s26 = sadd.s32 %s25, 1
      %s27 = scalar_select %p24, %s25, %s26
      %p30 = pneg %p24
      %p31 = scmp.eq.s32.totalorder %s15, 1
      %p32 = por %p30, %p31
      %p33 = scmp.ne.s32.totalorder %s25, %s28
      %p34 = scmp.eq.s32.totalorder %s15, 0
      %p35 = por %p33, %p34
      %p36 = scmp.ne.s32.totalorder %s25, %s28
      %p37 = scmp.eq.s32.totalorder %s20, 1
      %p38 = por %p36, %p37
      %p39 = scmp.ne.s32.totalorder %s28, %s29
      %p40 = scmp.eq.s32.totalorder %s20, 0
      %p41 = por %p39, %p40
      %p42 = scmp.ne.s32.totalorder %s28, %s29
      %p43 = scmp.eq.s32.totalorder %s21, 1
      %p44 = por %p42, %p43
      %p46 = scmp.ne.s32.totalorder %s29, %s45
      %p47 = scmp.eq.s32.totalorder %s21, 0
      %p48 = por %p46, %p47
      %s50 = sadd.s32 %s49, 1
      %p53 = scmp.eq.s32.totalorder %s15, 1
      %p54 = scmp.ne.s32.totalorder %s49, %s51
      %p55 = scmp.eq.s32.totalorder %s15, 0
      %p56 = por %p54, %p55
      %p57 = scmp.ne.s32.totalorder %s49, %s51
      %p58 = scmp.eq.s32.totalorder %s20, 1
      %p59 = por %p57, %p58
      %p60 = scmp.ne.s32.totalorder %s51, %s52
      %p61 = scmp.eq.s32.totalorder %s20, 0
      %p62 = por %p60, %p61
      %p63 = scmp.ne.s32.totalorder %s51, %s52
      %p64 = scmp.eq.s32.totalorder %s21, 1
      %p65 = por %p63, %p64
      %p67 = scmp.ne.s32.totalorder %s52, %s66
      %p68 = scmp.eq.s32.totalorder %s21, 0
      %p69 = por %p67, %p68
      %s71 = sadd.s32 %s70, 1
      %p74 = scmp.eq.s32.totalorder %s15, 1
      %p75 = scmp.ne.s32.totalorder %s70, %s72
      %p76 = scmp.eq.s32.totalorder %s15, 0
      %p77 = por %p75, %p76
      %p78 = scmp.ne.s32.totalorder %s70, %s72
      %p79 = scmp.eq.s32.totalorder %s20, 1
      %p80 = por %p78, %p79
      %p81 = scmp.ne.s32.totalorder %s72, %s73
      %p82 = scmp.eq.s32.totalorder %s20, 0
      %p83 = por %p81, %p82
      %p84 = scmp.ne.s32.totalorder %s72, %s73
      %p85 = scmp.eq.s32.totalorder %s21, 1
      %p86 = por %p84, %p85
      %p88 = scmp.ne.s32.totalorder %s73, %s87
      %p89 = scmp.eq.s32.totalorder %s21, 0
      %p90 = por %p88, %p89
      %s91 = ssub.s32 %s15, %s22
      %p92 = scmp.eq.s32.totalorder %s91, 0
      %s94 = sadd.s32 %s93, 1
      %s95 = scalar_select %p92, %s93, %s94
      %p98 = pneg %p92
      %p99 = scmp.eq.s32.totalorder %s15, 1
      %p100 = por %p98, %p99
      %p101 = scmp.ne.s32.totalorder %s93, %s96
      %p102 = scmp.eq.s32.totalorder %s15, 0
      %p103 = por %p101, %p102
      %p104 = scmp.ne.s32.totalorder %s93, %s96
      %p105 = scmp.eq.s32.totalorder %s20, 1
      %p106 = por %p104, %p105
      %p107 = scmp.ne.s32.totalorder %s96, %s97
      %p108 = scmp.eq.s32.totalorder %s20, 0
      %p109 = por %p107, %p108
      %p110 = scmp.ne.s32.totalorder %s96, %s97
      %p111 = scmp.eq.s32.totalorder %s21, 1
      %p112 = por %p110, %p111
      %p114 = scmp.ne.s32.totalorder %s97, %s113
      %p115 = scmp.eq.s32.totalorder %s21, 0
      %p116 = por %p114, %p115
      %p117 = scmp.le.s32.totalorder 1, %s15
      %p118 = scmp.lt.s32.totalorder %s15, 3
      %p119 = pnand %p117, %p118
      %p120 = pneg %p119
      // Predicated region
      $region9: #{tpu_custom_call.1} parent=5 // pred_check
        _
      $region10: #{tpu_custom_call.1} parent=5 // pred_check_branch
        %122 = sbr.rel (%p119) target = $region12
      $region11: #{tpu_custom_call.1} parent=5 // pred_region
        %s123 = ssub.s32 %s15, 1
        // Predicated region
        $region13: #{tpu_custom_call.1} parent=11 // pred_check
          %p124 = pneg %p62
        $region14: #{tpu_custom_call.1} parent=11 // pred_check_branch
          %126 = sbr.rel (%p124) target = $region16
        $region15: #{tpu_custom_call.1} parent=11 // pred_region
          _
        $region16: #{tpu_custom_call.1} parent=11 // pred_fallthru
          _
        // Predicated region
        $region17: #{tpu_custom_call.1} parent=11 // pred_check
          %p127 = pneg %p83
        $region18: #{tpu_custom_call.1} parent=11 // pred_check_branch
          %129 = sbr.rel (%p127) target = $region20
        $region19: #{tpu_custom_call.1} parent=11 // pred_region
          _
        $region20: #{tpu_custom_call.1} parent=11 // pred_fallthru
          _
      $region12: #{tpu_custom_call.1} parent=5 // pred_fallthru
        _
      %p130 = scmp.lt.s32.totalorder %s15, 2
      // Predicated region
      $region21: #{tpu_custom_call.1} parent=5 // pred_check
        %p131 = pneg %p130
      $region22: #{tpu_custom_call.1} parent=5 // pred_check_branch
        %133 = sbr.rel (%p131) target = $region24
      $region23: #{tpu_custom_call.1} parent=5 // pred_region
        // Predicated region
        $region25: #{tpu_custom_call.1} parent=23 // pred_check
          %p134 = pneg %p35
        $region26: #{tpu_custom_call.1} parent=23 // pred_check_branch
          %136 = sbr.rel (%p134) target = $region28
        $region27: #{tpu_custom_call.1} parent=23 // pred_region
          %s137 = sand.u32 %s25, 1
          %s138 = scalar_lea.sflag [#allocation3], %s137
          %s139 = sand.u32 %s25, 1
          %s140 = smul.addr %s139, 128
          %s141 = scalar_lea.vmem [#allocation2], %s140
          %143 = vsyncadd %s138, 0
          %s144 = smul.addr %s15, 16
          %s145 = smul.addr %s144, 8
          %s146 = scalar_lea.hbm %s0, %s145
          %s147 = sshll.u32 %s146, 4
          %s148 = int_to_ptr.hbm [resolvable:$true] %s147
          %s149 = sshll.u32 %s141, 4
          %s150 = int_to_ptr.vmem [resolvable:$true] %s149
          %155 = dma.hbm_to_vmem [thread:$0]  %s148, 2048, %s150, %s138, 256, 256, 16
        $region28: #{tpu_custom_call.1} parent=23 // pred_fallthru
          _
      $region24: #{tpu_custom_call.1} parent=5 // pred_fallthru
        _
      %p156 = scmp.le.s32.totalorder 1, %s15
      %p157 = scmp.lt.s32.totalorder %s15, 3
      %p158 = pnand %p156, %p157
      %p159 = pneg %p158
      // Predicated region
      $region29: #{tpu_custom_call.1} parent=5 // pred_check
        _
      $region30: #{tpu_custom_call.1} parent=5 // pred_check_branch
        %161 = sbr.rel (%p158) target = $region32
      $region31: #{tpu_custom_call.1} parent=5 // pred_region
        %s162 = ssub.s32 %s15, 1
        %s163 = sand.u32 %s28, 1
        %s164 = scalar_lea.sflag [#allocation3], %s163
        %s165 = sand.u32 %s28, 1
        %s166 = smul.addr %s165, 128
        %s167 = scalar_lea.vmem [#allocation2], %s166
        // Predicated region
        $region33: #{tpu_custom_call.1} parent=31 // pred_check
          %p168 = pneg %p41
        $region34: #{tpu_custom_call.1} parent=31 // pred_check_branch
          %170 = sbr.rel (%p168) target = $region36
        $region35: #{tpu_custom_call.1} parent=31 // pred_region
          %172 = dma.done %s164, 2048
        $region36: #{tpu_custom_call.1} parent=31 // pred_fallthru
          _
        %s173 = sand.u32 %s28, 1
        %s174 = scalar_lea.sflag [#allocation3], %s173
        %s175 = sand.u32 %s28, 1
        %s176 = smul.addr %s175, 128
        %s177 = scalar_lea.vmem [#allocation2], %s176
        %p178 = pneg %p41
        %p179 = pneg %p38
        %p180 = pneg %p62
        %p181 = pneg %p59
        %p182 = pneg %p83
        %p183 = pneg %p80
        %p184 = pneg %p109
        %p185 = pneg %p106
        %s186 = sand.u32 %s96, 1
        %s187 = scalar_lea.sflag [#allocation4], %s186
        %s188 = sand.u32 %s96, 1
        %s189 = smul.addr %s188, 128
        %s190 = scalar_lea.vmem [#allocation5], %s189
        %v191 = vld [vmem:[%s167] sm:$0xff]
        %v192 = vld [vmem:[%s167 + $0x8] sm:$0xff]
        %v193 = vld [vmem:[%s167 + $0x10] sm:$0xff]
        %v194 = vld [vmem:[%s167 + $0x18] sm:$0xff]
        %v195 = vld [vmem:[%s167 + $0x20] sm:$0xff]
        %v196 = vld [vmem:[%s167 + $0x28] sm:$0xff]
        %v197 = vld [vmem:[%s167 + $0x30] sm:$0xff]
        %v198 = vld [vmem:[%s167 + $0x38] sm:$0xff]
        %v199 = vld [vmem:[%s167 + $0x40] sm:$0xff]
        %v200 = vld [vmem:[%s167 + $0x48] sm:$0xff]
        %v201 = vld [vmem:[%s167 + $0x50] sm:$0xff]
        %v202 = vld [vmem:[%s167 + $0x58] sm:$0xff]
        %v203 = vld [vmem:[%s167 + $0x60] sm:$0xff]
        %v204 = vld [vmem:[%s167 + $0x68] sm:$0xff]
        %v205 = vld [vmem:[%s167 + $0x70] sm:$0xff]
        %v206 = vld [vmem:[%s167 + $0x78] sm:$0xff]
        %v207 = vld [vmem:[%s1] sm:$0xf]
        %v208 = vld [vmem:[%s2] sm:$0xff]
        %v209 = vld [vmem:[%s2 + $0x8] sm:$0xff]
        %v210 = vld [vmem:[%s2 + $0x10] sm:$0xff]
        %v211 = vld [vmem:[%s2 + $0x18] sm:$0xff]
        %v212 = vld [vmem:[%s2 + $0x20] sm:$0xff]
        %v213 = vld [vmem:[%s2 + $0x28] sm:$0xff]
        %v214 = vld [vmem:[%s2 + $0x30] sm:$0xff]
        %v215 = vld [vmem:[%s2 + $0x38] sm:$0xff]
        %v216 = vadd.f32 %v191, %v192
        %217 = vadd.xlane.f32.xlu0 %v216
        %v218 = vpop.xlane.xlu0 %217
        %v219 = vadd.f32 %v193, %v194
        %220 = vadd.xlane.f32.xlu0 %v219
        %v221 = vpop.xlane.xlu0 %220
        %v222 = vadd.f32 %v195, %v196
        %223 = vadd.xlane.f32.xlu0 %v222
        %v224 = vpop.xlane.xlu0 %223
        %v225 = vadd.f32 %v197, %v198
        %226 = vadd.xlane.f32.xlu0 %v225
        %v227 = vpop.xlane.xlu0 %226
        %v228 = vadd.f32 %v199, %v200
        %229 = vadd.xlane.f32.xlu0 %v228
        %v230 = vpop.xlane.xlu0 %229
        %v231 = vadd.f32 %v201, %v202
        %232 = vadd.xlane.f32.xlu0 %v231
        %v233 = vpop.xlane.xlu0 %232
        %v234 = vadd.f32 %v203, %v204
        %235 = vadd.xlane.f32.xlu0 %v234
        %v236 = vpop.xlane.xlu0 %235
        %v237 = vadd.f32 %v205, %v206
        %238 = vadd.xlane.f32.xlu0 %v237
        %v239 = vpop.xlane.xlu0 %238
        %v240 = vrcp.pop 256.0
        %v241 = vmul.f32 256.0, %v240
        %v242 = vsub.f32 1.0, %v241
        %v243 = vmul.f32 %v240, %v242
        %v244 = vadd.f32 %v240, %v243
        %vm245 = vweird.f32 %v240
        %v246 = vsel %vm245, %v240, %v244
        %v247 = vmul.f32 %v218, %v246
        %v248 = vmul.f32 %v221, %v246
        %v249 = vmul.f32 %v224, %v246
        %v250 = vmul.f32 %v227, %v246
        %v251 = vmul.f32 %v230, %v246
        %v252 = vmul.f32 %v233, %v246
        %v253 = vmul.f32 %v236, %v246
        %v254 = vmul.f32 %v239, %v246
        %v256 = vperm.slane %v207, 0
        %v257 = vlaneseq
        %v258 = vshrl.u32 %v257, 7
        %260 = vset.pattern.permute.xlu0 %v258
        %261 = vperm.xlu0 %260, %v256
        %v262 = vpop.permute.xlu0 %261
        %v263 = vlaneseq
        %v264 = vshrl.u32 %v263, 7
        %v265 = vadd.s32 %v264, 8
        %266 = vset.pattern.permute.xlu0 %v265
        %267 = vperm.xlu0 %266, %v256
        %v268 = vpop.permute.xlu0 %267
        %v269 = vlaneseq
        %v270 = vshrl.u32 %v269, 7
        %v271 = vadd.s32 %v270, 16
        %272 = vset.pattern.permute.xlu0 %v271
        %273 = vperm.xlu0 %272, %v256
        %v274 = vpop.permute.xlu0 %273
        %v275 = vlaneseq
        %v276 = vshrl.u32 %v275, 7
        %v277 = vadd.s32 %v276, 24
        %278 = vset.pattern.permute.xlu0 %v277
        %279 = vperm.xlu0 %278, %v256
        %v280 = vpop.permute.xlu0 %279
        %v281 = vlaneseq
        %v282 = vshrl.u32 %v281, 7
        %v283 = vadd.s32 %v282, 32
        %284 = vset.pattern.permute.xlu0 %v283
        %285 = vperm.xlu0 %284, %v256
        %v286 = vpop.permute.xlu0 %285
        %v287 = vlaneseq
        %v288 = vshrl.u32 %v287, 7
        %v289 = vadd.s32 %v288, 40
        %290 = vset.pattern.permute.xlu0 %v289
        %291 = vperm.xlu0 %290, %v256
        %v292 = vpop.permute.xlu0 %291
        %v293 = vlaneseq
        %v294 = vshrl.u32 %v293, 7
        %v295 = vadd.s32 %v294, 48
        %296 = vset.pattern.permute.xlu0 %v295
        %297 = vperm.xlu0 %296, %v256
        %v298 = vpop.permute.xlu0 %297
        %v299 = vlaneseq
        %v300 = vshrl.u32 %v299, 7
        %v301 = vadd.s32 %v300, 56
        %302 = vset.pattern.permute.xlu0 %v301
        %303 = vperm.xlu0 %302, %v256
        %v304 = vpop.permute.xlu0 %303
        %v305 = vperm.slane %v207, 1
        %v306 = vlaneseq
        %v307 = vshrl.u32 %v306, 7
        %309 = vset.pattern.permute.xlu0 %v307
        %310 = vperm.xlu0 %309, %v305
        %v311 = vpop.permute.xlu0 %310
        %v312 = vlaneseq
        %v313 = vshrl.u32 %v312, 7
        %v314 = vadd.s32 %v313, 8
        %315 = vset.pattern.permute.xlu0 %v314
        %316 = vperm.xlu0 %315, %v305
        %v317 = vpop.permute.xlu0 %316
        %v318 = vlaneseq
        %v319 = vshrl.u32 %v318, 7
        %v320 = vadd.s32 %v319, 16
        %321 = vset.pattern.permute.xlu0 %v320
        %322 = vperm.xlu0 %321, %v305
        %v323 = vpop.permute.xlu0 %322
        %v324 = vlaneseq
        %v325 = vshrl.u32 %v324, 7
        %v326 = vadd.s32 %v325, 24
        %327 = vset.pattern.permute.xlu0 %v326
        %328 = vperm.xlu0 %327, %v305
        %v329 = vpop.permute.xlu0 %328
        %v330 = vlaneseq
        %v331 = vshrl.u32 %v330, 7
        %v332 = vadd.s32 %v331, 32
        %333 = vset.pattern.permute.xlu0 %v332
        %334 = vperm.xlu0 %333, %v305
        %v335 = vpop.permute.xlu0 %334
        %v336 = vlaneseq
        %v337 = vshrl.u32 %v336, 7
        %v338 = vadd.s32 %v337, 40
        %339 = vset.pattern.permute.xlu0 %v338
        %340 = vperm.xlu0 %339, %v305
        %v341 = vpop.permute.xlu0 %340
        %v342 = vlaneseq
        %v343 = vshrl.u32 %v342, 7
        %v344 = vadd.s32 %v343, 48
        %345 = vset.pattern.permute.xlu0 %v344
        %346 = vperm.xlu0 %345, %v305
        %v347 = vpop.permute.xlu0 %346
        %v348 = vlaneseq
        %v349 = vshrl.u32 %v348, 7
        %v350 = vadd.s32 %v349, 56
        %351 = vset.pattern.permute.xlu0 %v350
        %352 = vperm.xlu0 %351, %v305
        %v353 = vpop.permute.xlu0 %352
        %v354 = vperm.slane %v207, 2
        %v355 = vlaneseq
        %v356 = vshrl.u32 %v355, 7
        %358 = vset.pattern.permute.xlu0 %v356
        %359 = vperm.xlu0 %358, %v354
        %v360 = vpop.permute.xlu0 %359
        %v361 = vlaneseq
        %v362 = vshrl.u32 %v361, 7
        %v363 = vadd.s32 %v362, 8
        %364 = vset.pattern.permute.xlu0 %v363
        %365 = vperm.xlu0 %364, %v354
        %v366 = vpop.permute.xlu0 %365
        %v367 = vlaneseq
        %v368 = vshrl.u32 %v367, 7
        %v369 = vadd.s32 %v368, 16
        %370 = vset.pattern.permute.xlu0 %v369
        %371 = vperm.xlu0 %370, %v354
        %v372 = vpop.permute.xlu0 %371
        %v373 = vlaneseq
        %v374 = vshrl.u32 %v373, 7
        %v375 = vadd.s32 %v374, 24
        %376 = vset.pattern.permute.xlu0 %v375
        %377 = vperm.xlu0 %376, %v354
        %v378 = vpop.permute.xlu0 %377
        %v379 = vlaneseq
        %v380 = vshrl.u32 %v379, 7
        %v381 = vadd.s32 %v380, 32
        %382 = vset.pattern.permute.xlu0 %v381
        %383 = vperm.xlu0 %382, %v354
        %v384 = vpop.permute.xlu0 %383
        %v385 = vlaneseq
        %v386 = vshrl.u32 %v385, 7
        %v387 = vadd.s32 %v386, 40
        %388 = vset.pattern.permute.xlu0 %v387
        %389 = vperm.xlu0 %388, %v354
        %v390 = vpop.permute.xlu0 %389
        %v391 = vlaneseq
        %v392 = vshrl.u32 %v391, 7
        %v393 = vadd.s32 %v392, 48
        %394 = vset.pattern.permute.xlu0 %v393
        %395 = vperm.xlu0 %394, %v354
        %v396 = vpop.permute.xlu0 %395
        %v397 = vlaneseq
        %v398 = vshrl.u32 %v397, 7
        %v399 = vadd.s32 %v398, 56
        %400 = vset.pattern.permute.xlu0 %v399
        %401 = vperm.xlu0 %400, %v354
        %v402 = vpop.permute.xlu0 %401
        %v403 = vperm.slane %v207, 3
        %v404 = vlaneseq
        %v405 = vshrl.u32 %v404, 7
        %407 = vset.pattern.permute.xlu0 %v405
        %408 = vperm.xlu0 %407, %v403
        %v409 = vpop.permute.xlu0 %408
        %v410 = vlaneseq
        %v411 = vshrl.u32 %v410, 7
        %v412 = vadd.s32 %v411, 8
        %413 = vset.pattern.permute.xlu0 %v412
        %414 = vperm.xlu0 %413, %v403
        %v415 = vpop.permute.xlu0 %414
        %v416 = vlaneseq
        %v417 = vshrl.u32 %v416, 7
        %v418 = vadd.s32 %v417, 16
        %419 = vset.pattern.permute.xlu0 %v418
        %420 = vperm.xlu0 %419, %v403
        %v421 = vpop.permute.xlu0 %420
        %v422 = vlaneseq
        %v423 = vshrl.u32 %v422, 7
        %v424 = vadd.s32 %v423, 24
        %425 = vset.pattern.permute.xlu0 %v424
        %426 = vperm.xlu0 %425, %v403
        %v427 = vpop.permute.xlu0 %426
        %v428 = vlaneseq
        %v429 = vshrl.u32 %v428, 7
        %v430 = vadd.s32 %v429, 32
        %431 = vset.pattern.permute.xlu0 %v430
        %432 = vperm.xlu0 %431, %v403
        %v433 = vpop.permute.xlu0 %432
        %v434 = vlaneseq
        %v435 = vshrl.u32 %v434, 7
        %v436 = vadd.s32 %v435, 40
        %437 = vset.pattern.permute.xlu0 %v436
        %438 = vperm.xlu0 %437, %v403
        %v439 = vpop.permute.xlu0 %438
        %v440 = vlaneseq
        %v441 = vshrl.u32 %v440, 7
        %v442 = vadd.s32 %v441, 48
        %443 = vset.pattern.permute.xlu0 %v442
        %444 = vperm.xlu0 %443, %v403
        %v445 = vpop.permute.xlu0 %444
        %v446 = vlaneseq
        %v447 = vshrl.u32 %v446, 7
        %v448 = vadd.s32 %v447, 56
        %449 = vset.pattern.permute.xlu0 %v448
        %450 = vperm.xlu0 %449, %v403
        %v451 = vpop.permute.xlu0 %450
        %v484 = vmul.f32 %v247, %v262
        %v485 = vmul.f32 %v248, %v268
        %v486 = vmul.f32 %v249, %v274
        %v487 = vmul.f32 %v250, %v280
        %v488 = vmul.f32 %v251, %v286
        %v489 = vmul.f32 %v252, %v292
        %v490 = vmul.f32 %v253, %v298
        %v491 = vmul.f32 %v254, %v304
        %v492 = vmul.f32 %v247, %v311
        %v493 = vmul.f32 %v248, %v317
        %v494 = vmul.f32 %v249, %v323
        %v495 = vmul.f32 %v250, %v329
        %v496 = vmul.f32 %v251, %v335
        %v497 = vmul.f32 %v252, %v341
        %v498 = vmul.f32 %v253, %v347
        %v499 = vmul.f32 %v254, %v353
        %v500 = vmul.f32 %v247, %v360
        %v501 = vmul.f32 %v248, %v366
        %v502 = vmul.f32 %v249, %v372
        %v503 = vmul.f32 %v250, %v378
        %v504 = vmul.f32 %v251, %v384
        %v505 = vmul.f32 %v252, %v390
        %v506 = vmul.f32 %v253, %v396
        %v507 = vmul.f32 %v254, %v402
        %v508 = vmul.f32 %v247, %v409
        %v509 = vmul.f32 %v248, %v415
        %v510 = vmul.f32 %v249, %v421
        %v511 = vmul.f32 %v250, %v427
        %v512 = vmul.f32 %v251, %v433
        %v513 = vmul.f32 %v252, %v439
        %v514 = vmul.f32 %v253, %v445
        %v515 = vmul.f32 %v254, %v451
        %548 = vset.pattern.permute.xlu0 0
        %549 = vperm.xlu0 %548, %v484
        %v550 = vpop.permute.xlu0 %549
        %551 = vset.pattern.permute.xlu0 0
        %552 = vperm.xlu0 %551, %v485
        %v553 = vpop.permute.xlu0 %552
        %554 = vset.pattern.permute.xlu0 0
        %555 = vperm.xlu0 %554, %v486
        %v556 = vpop.permute.xlu0 %555
        %557 = vset.pattern.permute.xlu0 0
        %558 = vperm.xlu0 %557, %v487
        %v559 = vpop.permute.xlu0 %558
        %560 = vset.pattern.permute.xlu0 0
        %561 = vperm.xlu0 %560, %v488
        %v562 = vpop.permute.xlu0 %561
        %563 = vset.pattern.permute.xlu0 0
        %564 = vperm.xlu0 %563, %v489
        %v565 = vpop.permute.xlu0 %564
        %566 = vset.pattern.permute.xlu0 0
        %567 = vperm.xlu0 %566, %v490
        %v568 = vpop.permute.xlu0 %567
        %569 = vset.pattern.permute.xlu0 0
        %570 = vperm.xlu0 %569, %v491
        %v571 = vpop.permute.xlu0 %570
        %572 = vset.pattern.permute.xlu0 0
        %573 = vperm.xlu0 %572, %v492
        %v574 = vpop.permute.xlu0 %573
        %575 = vset.pattern.permute.xlu0 0
        %576 = vperm.xlu0 %575, %v493
        %v577 = vpop.permute.xlu0 %576
        %578 = vset.pattern.permute.xlu0 0
        %579 = vperm.xlu0 %578, %v494
        %v580 = vpop.permute.xlu0 %579
        %581 = vset.pattern.permute.xlu0 0
        %582 = vperm.xlu0 %581, %v495
        %v583 = vpop.permute.xlu0 %582
        %584 = vset.pattern.permute.xlu0 0
        %585 = vperm.xlu0 %584, %v496
        %v586 = vpop.permute.xlu0 %585
        %587 = vset.pattern.permute.xlu0 0
        %588 = vperm.xlu0 %587, %v497
        %v589 = vpop.permute.xlu0 %588
        %590 = vset.pattern.permute.xlu0 0
        %591 = vperm.xlu0 %590, %v498
        %v592 = vpop.permute.xlu0 %591
        %593 = vset.pattern.permute.xlu0 0
        %594 = vperm.xlu0 %593, %v499
        %v595 = vpop.permute.xlu0 %594
        %596 = vset.pattern.permute.xlu0 0
        %597 = vperm.xlu0 %596, %v500
        %v598 = vpop.permute.xlu0 %597
        %599 = vset.pattern.permute.xlu0 0
        %600 = vperm.xlu0 %599, %v501
        %v601 = vpop.permute.xlu0 %600
        %602 = vset.pattern.permute.xlu0 0
        %603 = vperm.xlu0 %602, %v502
        %v604 = vpop.permute.xlu0 %603
        %605 = vset.pattern.permute.xlu0 0
        %606 = vperm.xlu0 %605, %v503
        %v607 = vpop.permute.xlu0 %606
        %608 = vset.pattern.permute.xlu0 0
        %609 = vperm.xlu0 %608, %v504
        %v610 = vpop.permute.xlu0 %609
        %611 = vset.pattern.permute.xlu0 0
        %612 = vperm.xlu0 %611, %v505
        %v613 = vpop.permute.xlu0 %612
        %614 = vset.pattern.permute.xlu0 0
        %615 = vperm.xlu0 %614, %v506
        %v616 = vpop.permute.xlu0 %615
        %617 = vset.pattern.permute.xlu0 0
        %618 = vperm.xlu0 %617, %v507
        %v619 = vpop.permute.xlu0 %618
        %620 = vset.pattern.permute.xlu0 0
        %621 = vperm.xlu0 %620, %v508
        %v622 = vpop.permute.xlu0 %621
        %623 = vset.pattern.permute.xlu0 0
        %624 = vperm.xlu0 %623, %v509
        %v625 = vpop.permute.xlu0 %624
        %626 = vset.pattern.permute.xlu0 0
        %627 = vperm.xlu0 %626, %v510
        %v628 = vpop.permute.xlu0 %627
        %629 = vset.pattern.permute.xlu0 0
        %630 = vperm.xlu0 %629, %v511
        %v631 = vpop.permute.xlu0 %630
        %632 = vset.pattern.permute.xlu0 0
        %633 = vperm.xlu0 %632, %v512
        %v634 = vpop.permute.xlu0 %633
        %635 = vset.pattern.permute.xlu0 0
        %636 = vperm.xlu0 %635, %v513
        %v637 = vpop.permute.xlu0 %636
        %638 = vset.pattern.permute.xlu0 0
        %639 = vperm.xlu0 %638, %v514
        %v640 = vpop.permute.xlu0 %639
        %641 = vset.pattern.permute.xlu0 0
        %642 = vperm.xlu0 %641, %v515
        %v643 = vpop.permute.xlu0 %642
        %v644 = vlaneseq
        %v645 = vand.u32 %v644, 127
        %v646 = vperm.slane %v550, %v645
        %v647 = vadd.s32 %v645, 4294967288
        %v648 = vperm.slane %v553, %v647
        %vm649 = vcmask 130112
        %v650 = vsel %vm649, %v648, %v646
        %v651 = vadd.s32 %v645, 4294967280
        %v652 = vperm.slane %v556, %v651
        %vm653 = vcmask 195712
        %v654 = vsel %vm653, %v652, %v650
        %v655 = vadd.s32 %v645, 4294967272
        %v656 = vperm.slane %v559, %v655
        %vm657 = vcmask 261312
        %v658 = vsel %vm657, %v656, %v654
        %v659 = vadd.s32 %v645, 4294967264
        %v660 = vperm.slane %v562, %v659
        %vm661 = vcmask 326912
        %v662 = vsel %vm661, %v660, %v658
        %v663 = vadd.s32 %v645, 4294967256
        %v664 = vperm.slane %v565, %v663
        %vm665 = vcmask 392512
        %v666 = vsel %vm665, %v664, %v662
        %v667 = vadd.s32 %v645, 4294967248
        %v668 = vperm.slane %v568, %v667
        %vm669 = vcmask 458112
        %v670 = vsel %vm669, %v668, %v666
        %v671 = vadd.s32 %v645, 4294967240
        %v672 = vperm.slane %v571, %v671
        %vm673 = vcmask 523712
        %v674 = vsel %vm673, %v672, %v670
        %v675 = vperm.slane %v574, %v645
        %v676 = vperm.slane %v577, %v647
        %v677 = vsel %vm649, %v676, %v675
        %v678 = vperm.slane %v580, %v651
        %v679 = vsel %vm653, %v678, %v677
        %v680 = vperm.slane %v583, %v655
        %v681 = vsel %vm657, %v680, %v679
        %v682 = vperm.slane %v586, %v659
        %v683 = vsel %vm661, %v682, %v681
        %v684 = vperm.slane %v589, %v663
        %v685 = vsel %vm665, %v684, %v683
        %v686 = vperm.slane %v592, %v667
        %v687 = vsel %vm669, %v686, %v685
        %v688 = vperm.slane %v595, %v671
        %v689 = vsel %vm673, %v688, %v687
        %v690 = vperm.slane %v598, %v645
        %v691 = vperm.slane %v601, %v647
        %v692 = vsel %vm649, %v691, %v690
        %v693 = vperm.slane %v604, %v651
        %v694 = vsel %vm653, %v693, %v692
        %v695 = vperm.slane %v607, %v655
        %v696 = vsel %vm657, %v695, %v694
        %v697 = vperm.slane %v610, %v659
        %v698 = vsel %vm661, %v697, %v696
        %v699 = vperm.slane %v613, %v663
        %v700 = vsel %vm665, %v699, %v698
        %v701 = vperm.slane %v616, %v667
        %v702 = vsel %vm669, %v701, %v700
        %v703 = vperm.slane %v619, %v671
        %v704 = vsel %vm673, %v703, %v702
        %v705 = vperm.slane %v622, %v645
        %v706 = vperm.slane %v625, %v647
        %v707 = vsel %vm649, %v706, %v705
        %v708 = vperm.slane %v628, %v651
        %v709 = vsel %vm653, %v708, %v707
        %v710 = vperm.slane %v631, %v655
        %v711 = vsel %vm657, %v710, %v709
        %v712 = vperm.slane %v634, %v659
        %v713 = vsel %vm661, %v712, %v711
        %v714 = vperm.slane %v637, %v663
        %v715 = vsel %vm665, %v714, %v713
        %v716 = vperm.slane %v640, %v667
        %v717 = vsel %vm669, %v716, %v715
        %v718 = vperm.slane %v643, %v671
        %v719 = vsel %vm673, %v718, %v717
        %vm720 = vcmask 1041409
        %v721 = vsel %vm720, %v689, %v674
        %vm722 = vcmask 1042434
        %v723 = vsel %vm722, %v704, %v721
        %vm724 = vcmask 1043459
        %v725 = vsel %vm724, %v719, %v723
        %vm727 = vcmask 519168
        %v728 = vsel %vm727, %v725, 0.0
        %729 = vadd.xlane.f32.xlu0 %v728
        %v730 = vpop.xlane.xlu0 %729
        %v731 = vmax.f32 %v730, 0.0
        %v740 = vperm.slane %v208, 0
        %v741 = vlaneseq
        %v742 = vshrl.u32 %v741, 7
        %744 = vset.pattern.permute.xlu0 %v742
        %745 = vperm.xlu0 %744, %v740
        %v746 = vpop.permute.xlu0 %745
        %v747 = vperm.slane %v208, 1
        %v748 = vlaneseq
        %v749 = vshrl.u32 %v748, 7
        %751 = vset.pattern.permute.xlu0 %v749
        %752 = vperm.xlu0 %751, %v747
        %v753 = vpop.permute.xlu0 %752
        %v754 = vperm.slane %v208, 2
        %v755 = vlaneseq
        %v756 = vshrl.u32 %v755, 7
        %758 = vset.pattern.permute.xlu0 %v756
        %759 = vperm.xlu0 %758, %v754
        %v760 = vpop.permute.xlu0 %759
        %v761 = vperm.slane %v208, 3
        %v762 = vlaneseq
        %v763 = vshrl.u32 %v762, 7
        %765 = vset.pattern.permute.xlu0 %v763
        %766 = vperm.xlu0 %765, %v761
        %v767 = vpop.permute.xlu0 %766
        %v768 = vperm.slane %v208, 4
        %v769 = vlaneseq
        %v770 = vshrl.u32 %v769, 7
        %772 = vset.pattern.permute.xlu0 %v770
        %773 = vperm.xlu0 %772, %v768
        %v774 = vpop.permute.xlu0 %773
        %v775 = vperm.slane %v208, 5
        %v776 = vlaneseq
        %v777 = vshrl.u32 %v776, 7
        %779 = vset.pattern.permute.xlu0 %v777
        %780 = vperm.xlu0 %779, %v775
        %v781 = vpop.permute.xlu0 %780
        %v782 = vperm.slane %v208, 6
        %v783 = vlaneseq
        %v784 = vshrl.u32 %v783, 7
        %786 = vset.pattern.permute.xlu0 %v784
        %787 = vperm.xlu0 %786, %v782
        %v788 = vpop.permute.xlu0 %787
        %v789 = vperm.slane %v208, 7
        %v790 = vlaneseq
        %v791 = vshrl.u32 %v790, 7
        %793 = vset.pattern.permute.xlu0 %v791
        %794 = vperm.xlu0 %793, %v789
        %v795 = vpop.permute.xlu0 %794
        %v796 = vperm.slane %v209, 0
        %v797 = vlaneseq
        %v798 = vshrl.u32 %v797, 7
        %800 = vset.pattern.permute.xlu0 %v798
        %801 = vperm.xlu0 %800, %v796
        %v802 = vpop.permute.xlu0 %801
        %v803 = vperm.slane %v209, 1
        %v804 = vlaneseq
        %v805 = vshrl.u32 %v804, 7
        %807 = vset.pattern.permute.xlu0 %v805
        %808 = vperm.xlu0 %807, %v803
        %v809 = vpop.permute.xlu0 %808
        %v810 = vperm.slane %v209, 2
        %v811 = vlaneseq
        %v812 = vshrl.u32 %v811, 7
        %814 = vset.pattern.permute.xlu0 %v812
        %815 = vperm.xlu0 %814, %v810
        %v816 = vpop.permute.xlu0 %815
        %v817 = vperm.slane %v209, 3
        %v818 = vlaneseq
        %v819 = vshrl.u32 %v818, 7
        %821 = vset.pattern.permute.xlu0 %v819
        %822 = vperm.xlu0 %821, %v817
        %v823 = vpop.permute.xlu0 %822
        %v824 = vperm.slane %v209, 4
        %v825 = vlaneseq
        %v826 = vshrl.u32 %v825, 7
        %828 = vset.pattern.permute.xlu0 %v826
        %829 = vperm.xlu0 %828, %v824
        %v830 = vpop.permute.xlu0 %829
        %v831 = vperm.slane %v209, 5
        %v832 = vlaneseq
        %v833 = vshrl.u32 %v832, 7
        %835 = vset.pattern.permute.xlu0 %v833
        %836 = vperm.xlu0 %835, %v831
        %v837 = vpop.permute.xlu0 %836
        %v838 = vperm.slane %v209, 6
        %v839 = vlaneseq
        %v840 = vshrl.u32 %v839, 7
        %842 = vset.pattern.permute.xlu0 %v840
        %843 = vperm.xlu0 %842, %v838
        %v844 = vpop.permute.xlu0 %843
        %v845 = vperm.slane %v209, 7
        %v846 = vlaneseq
        %v847 = vshrl.u32 %v846, 7
        %849 = vset.pattern.permute.xlu0 %v847
        %850 = vperm.xlu0 %849, %v845
        %v851 = vpop.permute.xlu0 %850
        %v852 = vperm.slane %v210, 0
        %v853 = vlaneseq
        %v854 = vshrl.u32 %v853, 7
        %856 = vset.pattern.permute.xlu0 %v854
        %857 = vperm.xlu0 %856, %v852
        %v858 = vpop.permute.xlu0 %857
        %v859 = vperm.slane %v210, 1
        %v860 = vlaneseq
        %v861 = vshrl.u32 %v860, 7
        %863 = vset.pattern.permute.xlu0 %v861
        %864 = vperm.xlu0 %863, %v859
        %v865 = vpop.permute.xlu0 %864
        %v866 = vperm.slane %v210, 2
        %v867 = vlaneseq
        %v868 = vshrl.u32 %v867, 7
        %870 = vset.pattern.permute.xlu0 %v868
        %871 = vperm.xlu0 %870, %v866
        %v872 = vpop.permute.xlu0 %871
        %v873 = vperm.slane %v210, 3
        %v874 = vlaneseq
        %v875 = vshrl.u32 %v874, 7
        %877 = vset.pattern.permute.xlu0 %v875
        %878 = vperm.xlu0 %877, %v873
        %v879 = vpop.permute.xlu0 %878
        %v880 = vperm.slane %v210, 4
        %v881 = vlaneseq
        %v882 = vshrl.u32 %v881, 7
        %884 = vset.pattern.permute.xlu0 %v882
        %885 = vperm.xlu0 %884, %v880
        %v886 = vpop.permute.xlu0 %885
        %v887 = vperm.slane %v210, 5
        %v888 = vlaneseq
        %v889 = vshrl.u32 %v888, 7
        %891 = vset.pattern.permute.xlu0 %v889
        %892 = vperm.xlu0 %891, %v887
        %v893 = vpop.permute.xlu0 %892
        %v894 = vperm.slane %v210, 6
        %v895 = vlaneseq
        %v896 = vshrl.u32 %v895, 7
        %898 = vset.pattern.permute.xlu0 %v896
        %899 = vperm.xlu0 %898, %v894
        %v900 = vpop.permute.xlu0 %899
        %v901 = vperm.slane %v210, 7
        %v902 = vlaneseq
        %v903 = vshrl.u32 %v902, 7
        %905 = vset.pattern.permute.xlu0 %v903
        %906 = vperm.xlu0 %905, %v901
        %v907 = vpop.permute.xlu0 %906
        %v908 = vperm.slane %v211, 0
        %v909 = vlaneseq
        %v910 = vshrl.u32 %v909, 7
        %912 = vset.pattern.permute.xlu0 %v910
        %913 = vperm.xlu0 %912, %v908
        %v914 = vpop.permute.xlu0 %913
        %v915 = vperm.slane %v211, 1
        %v916 = vlaneseq
        %v917 = vshrl.u32 %v916, 7
        %919 = vset.pattern.permute.xlu0 %v917
        %920 = vperm.xlu0 %919, %v915
        %v921 = vpop.permute.xlu0 %920
        %v922 = vperm.slane %v211, 2
        %v923 = vlaneseq
        %v924 = vshrl.u32 %v923, 7
        %926 = vset.pattern.permute.xlu0 %v924
        %927 = vperm.xlu0 %926, %v922
        %v928 = vpop.permute.xlu0 %927
        %v929 = vperm.slane %v211, 3
        %v930 = vlaneseq
        %v931 = vshrl.u32 %v930, 7
        %933 = vset.pattern.permute.xlu0 %v931
        %934 = vperm.xlu0 %933, %v929
        %v935 = vpop.permute.xlu0 %934
        %v936 = vperm.slane %v211, 4
        %v937 = vlaneseq
        %v938 = vshrl.u32 %v937, 7
        %940 = vset.pattern.permute.xlu0 %v938
        %941 = vperm.xlu0 %940, %v936
        %v942 = vpop.permute.xlu0 %941
        %v943 = vperm.slane %v211, 5
        %v944 = vlaneseq
        %v945 = vshrl.u32 %v944, 7
        %947 = vset.pattern.permute.xlu0 %v945
        %948 = vperm.xlu0 %947, %v943
        %v949 = vpop.permute.xlu0 %948
        %v950 = vperm.slane %v211, 6
        %v951 = vlaneseq
        %v952 = vshrl.u32 %v951, 7
        %954 = vset.pattern.permute.xlu0 %v952
        %955 = vperm.xlu0 %954, %v950
        %v956 = vpop.permute.xlu0 %955
        %v957 = vperm.slane %v211, 7
        %v958 = vlaneseq
        %v959 = vshrl.u32 %v958, 7
        %961 = vset.pattern.permute.xlu0 %v959
        %962 = vperm.xlu0 %961, %v957
        %v963 = vpop.permute.xlu0 %962
        %v964 = vperm.slane %v212, 0
        %v965 = vlaneseq
        %v966 = vshrl.u32 %v965, 7
        %968 = vset.pattern.permute.xlu0 %v966
        %969 = vperm.xlu0 %968, %v964
        %v970 = vpop.permute.xlu0 %969
        %v971 = vperm.slane %v212, 1
        %v972 = vlaneseq
        %v973 = vshrl.u32 %v972, 7
        %975 = vset.pattern.permute.xlu0 %v973
        %976 = vperm.xlu0 %975, %v971
        %v977 = vpop.permute.xlu0 %976
        %v978 = vperm.slane %v212, 2
        %v979 = vlaneseq
        %v980 = vshrl.u32 %v979, 7
        %982 = vset.pattern.permute.xlu0 %v980
        %983 = vperm.xlu0 %982, %v978
        %v984 = vpop.permute.xlu0 %983
        %v985 = vperm.slane %v212, 3
        %v986 = vlaneseq
        %v987 = vshrl.u32 %v986, 7
        %989 = vset.pattern.permute.xlu0 %v987
        %990 = vperm.xlu0 %989, %v985
        %v991 = vpop.permute.xlu0 %990
        %v992 = vperm.slane %v212, 4
        %v993 = vlaneseq
        %v994 = vshrl.u32 %v993, 7
        %996 = vset.pattern.permute.xlu0 %v994
        %997 = vperm.xlu0 %996, %v992
        %v998 = vpop.permute.xlu0 %997
        %v999 = vperm.slane %v212, 5
        %v1000 = vlaneseq
        %v1001 = vshrl.u32 %v1000, 7
        %1003 = vset.pattern.permute.xlu0 %v1001
        %1004 = vperm.xlu0 %1003, %v999
        %v1005 = vpop.permute.xlu0 %1004
        %v1006 = vperm.slane %v212, 6
        %v1007 = vlaneseq
        %v1008 = vshrl.u32 %v1007, 7
        %1010 = vset.pattern.permute.xlu0 %v1008
        %1011 = vperm.xlu0 %1010, %v1006
        %v1012 = vpop.permute.xlu0 %1011
        %v1013 = vperm.slane %v212, 7
        %v1014 = vlaneseq
        %v1015 = vshrl.u32 %v1014, 7
        %1017 = vset.pattern.permute.xlu0 %v1015
        %1018 = vperm.xlu0 %1017, %v1013
        %v1019 = vpop.permute.xlu0 %1018
        %v1020 = vperm.slane %v213, 0
        %v1021 = vlaneseq
        %v1022 = vshrl.u32 %v1021, 7
        %1024 = vset.pattern.permute.xlu0 %v1022
        %1025 = vperm.xlu0 %1024, %v1020
        %v1026 = vpop.permute.xlu0 %1025
        %v1027 = vperm.slane %v213, 1
        %v1028 = vlaneseq
        %v1029 = vshrl.u32 %v1028, 7
        %1031 = vset.pattern.permute.xlu0 %v1029
        %1032 = vperm.xlu0 %1031, %v1027
        %v1033 = vpop.permute.xlu0 %1032
        %v1034 = vperm.slane %v213, 2
        %v1035 = vlaneseq
        %v1036 = vshrl.u32 %v1035, 7
        %1038 = vset.pattern.permute.xlu0 %v1036
        %1039 = vperm.xlu0 %1038, %v1034
        %v1040 = vpop.permute.xlu0 %1039
        %v1041 = vperm.slane %v213, 3
        %v1042 = vlaneseq
        %v1043 = vshrl.u32 %v1042, 7
        %1045 = vset.pattern.permute.xlu0 %v1043
        %1046 = vperm.xlu0 %1045, %v1041
        %v1047 = vpop.permute.xlu0 %1046
        %v1048 = vperm.slane %v213, 4
        %v1049 = vlaneseq
        %v1050 = vshrl.u32 %v1049, 7
        %1052 = vset.pattern.permute.xlu0 %v1050
        %1053 = vperm.xlu0 %1052, %v1048
        %v1054 = vpop.permute.xlu0 %1053
        %v1055 = vperm.slane %v213, 5
        %v1056 = vlaneseq
        %v1057 = vshrl.u32 %v1056, 7
        %1059 = vset.pattern.permute.xlu0 %v1057
        %1060 = vperm.xlu0 %1059, %v1055
        %v1061 = vpop.permute.xlu0 %1060
        %v1062 = vperm.slane %v213, 6
        %v1063 = vlaneseq
        %v1064 = vshrl.u32 %v1063, 7
        %1066 = vset.pattern.permute.xlu0 %v1064
        %1067 = vperm.xlu0 %1066, %v1062
        %v1068 = vpop.permute.xlu0 %1067
        %v1069 = vperm.slane %v213, 7
        %v1070 = vlaneseq
        %v1071 = vshrl.u32 %v1070, 7
        %1073 = vset.pattern.permute.xlu0 %v1071
        %1074 = vperm.xlu0 %1073, %v1069
        %v1075 = vpop.permute.xlu0 %1074
        %v1076 = vperm.slane %v214, 0
        %v1077 = vlaneseq
        %v1078 = vshrl.u32 %v1077, 7
        %1080 = vset.pattern.permute.xlu0 %v1078
        %1081 = vperm.xlu0 %1080, %v1076
        %v1082 = vpop.permute.xlu0 %1081
        %v1083 = vperm.slane %v214, 1
        %v1084 = vlaneseq
        %v1085 = vshrl.u32 %v1084, 7
        %1087 = vset.pattern.permute.xlu0 %v1085
        %1088 = vperm.xlu0 %1087, %v1083
        %v1089 = vpop.permute.xlu0 %1088
        %v1090 = vperm.slane %v214, 2
        %v1091 = vlaneseq
        %v1092 = vshrl.u32 %v1091, 7
        %1094 = vset.pattern.permute.xlu0 %v1092
        %1095 = vperm.xlu0 %1094, %v1090
        %v1096 = vpop.permute.xlu0 %1095
        %v1097 = vperm.slane %v214, 3
        %v1098 = vlaneseq
        %v1099 = vshrl.u32 %v1098, 7
        %1101 = vset.pattern.permute.xlu0 %v1099
        %1102 = vperm.xlu0 %1101, %v1097
        %v1103 = vpop.permute.xlu0 %1102
        %v1104 = vperm.slane %v214, 4
        %v1105 = vlaneseq
        %v1106 = vshrl.u32 %v1105, 7
        %1108 = vset.pattern.permute.xlu0 %v1106
        %1109 = vperm.xlu0 %1108, %v1104
        %v1110 = vpop.permute.xlu0 %1109
        %v1111 = vperm.slane %v214, 5
        %v1112 = vlaneseq
        %v1113 = vshrl.u32 %v1112, 7
        %1115 = vset.pattern.permute.xlu0 %v1113
        %1116 = vperm.xlu0 %1115, %v1111
        %v1117 = vpop.permute.xlu0 %1116
        %v1118 = vperm.slane %v214, 6
        %v1119 = vlaneseq
        %v1120 = vshrl.u32 %v1119, 7
        %1122 = vset.pattern.permute.xlu0 %v1120
        %1123 = vperm.xlu0 %1122, %v1118
        %v1124 = vpop.permute.xlu0 %1123
        %v1125 = vperm.slane %v214, 7
        %v1126 = vlaneseq
        %v1127 = vshrl.u32 %v1126, 7
        %1129 = vset.pattern.permute.xlu0 %v1127
        %1130 = vperm.xlu0 %1129, %v1125
        %v1131 = vpop.permute.xlu0 %1130
        %v1132 = vperm.slane %v215, 0
        %v1133 = vlaneseq
        %v1134 = vshrl.u32 %v1133, 7
        %1136 = vset.pattern.permute.xlu0 %v1134
        %1137 = vperm.xlu0 %1136, %v1132
        %v1138 = vpop.permute.xlu0 %1137
        %v1139 = vperm.slane %v215, 1
        %v1140 = vlaneseq
        %v1141 = vshrl.u32 %v1140, 7
        %1143 = vset.pattern.permute.xlu0 %v1141
        %1144 = vperm.xlu0 %1143, %v1139
        %v1145 = vpop.permute.xlu0 %1144
        %v1146 = vperm.slane %v215, 2
        %v1147 = vlaneseq
        %v1148 = vshrl.u32 %v1147, 7
        %1150 = vset.pattern.permute.xlu0 %v1148
        %1151 = vperm.xlu0 %1150, %v1146
        %v1152 = vpop.permute.xlu0 %1151
        %v1153 = vperm.slane %v215, 3
        %v1154 = vlaneseq
        %v1155 = vshrl.u32 %v1154, 7
        %1157 = vset.pattern.permute.xlu0 %v1155
        %1158 = vperm.xlu0 %1157, %v1153
        %v1159 = vpop.permute.xlu0 %1158
        %v1160 = vperm.slane %v215, 4
        %v1161 = vlaneseq
        %v1162 = vshrl.u32 %v1161, 7
        %1164 = vset.pattern.permute.xlu0 %v1162
        %1165 = vperm.xlu0 %1164, %v1160
        %v1166 = vpop.permute.xlu0 %1165
        %v1167 = vperm.slane %v215, 5
        %v1168 = vlaneseq
        %v1169 = vshrl.u32 %v1168, 7
        %1171 = vset.pattern.permute.xlu0 %v1169
        %1172 = vperm.xlu0 %1171, %v1167
        %v1173 = vpop.permute.xlu0 %1172
        %v1174 = vperm.slane %v215, 6
        %v1175 = vlaneseq
        %v1176 = vshrl.u32 %v1175, 7
        %1178 = vset.pattern.permute.xlu0 %v1176
        %1179 = vperm.xlu0 %1178, %v1174
        %v1180 = vpop.permute.xlu0 %1179
        %v1181 = vperm.slane %v215, 7
        %v1182 = vlaneseq
        %v1183 = vshrl.u32 %v1182, 7
        %1185 = vset.pattern.permute.xlu0 %v1183
        %1186 = vperm.xlu0 %1185, %v1181
        %v1187 = vpop.permute.xlu0 %1186
        %v1252 = vmul.f32 %v731, %v746
        %v1253 = vmul.f32 %v731, %v753
        %v1254 = vmul.f32 %v731, %v760
        %v1255 = vmul.f32 %v731, %v767
        %v1256 = vmul.f32 %v731, %v774
        %v1257 = vmul.f32 %v731, %v781
        %v1258 = vmul.f32 %v731, %v788
        %v1259 = vmul.f32 %v731, %v795
        %v1260 = vmul.f32 %v731, %v802
        %v1261 = vmul.f32 %v731, %v809
        %v1262 = vmul.f32 %v731, %v816
        %v1263 = vmul.f32 %v731, %v823
        %v1264 = vmul.f32 %v731, %v830
        %v1265 = vmul.f32 %v731, %v837
        %v1266 = vmul.f32 %v731, %v844
        %v1267 = vmul.f32 %v731, %v851
        %v1268 = vmul.f32 %v731, %v858
        %v1269 = vmul.f32 %v731, %v865
        %v1270 = vmul.f32 %v731, %v872
        %v1271 = vmul.f32 %v731, %v879
        %v1272 = vmul.f32 %v731, %v886
        %v1273 = vmul.f32 %v731, %v893
        %v1274 = vmul.f32 %v731, %v900
        %v1275 = vmul.f32 %v731, %v907
        %v1276 = vmul.f32 %v731, %v914
        %v1277 = vmul.f32 %v731, %v921
        %v1278 = vmul.f32 %v731, %v928
        %v1279 = vmul.f32 %v731, %v935
        %v1280 = vmul.f32 %v731, %v942
        %v1281 = vmul.f32 %v731, %v949
        %v1282 = vmul.f32 %v731, %v956
        %v1283 = vmul.f32 %v731, %v963
        %v1284 = vmul.f32 %v731, %v970
        %v1285 = vmul.f32 %v731, %v977
        %v1286 = vmul.f32 %v731, %v984
        %v1287 = vmul.f32 %v731, %v991
        %v1288 = vmul.f32 %v731, %v998
        %v1289 = vmul.f32 %v731, %v1005
        %v1290 = vmul.f32 %v731, %v1012
        %v1291 = vmul.f32 %v731, %v1019
        %v1292 = vmul.f32 %v731, %v1026
        %v1293 = vmul.f32 %v731, %v1033
        %v1294 = vmul.f32 %v731, %v1040
        %v1295 = vmul.f32 %v731, %v1047
        %v1296 = vmul.f32 %v731, %v1054
        %v1297 = vmul.f32 %v731, %v1061
        %v1298 = vmul.f32 %v731, %v1068
        %v1299 = vmul.f32 %v731, %v1075
        %v1300 = vmul.f32 %v731, %v1082
        %v1301 = vmul.f32 %v731, %v1089
        %v1302 = vmul.f32 %v731, %v1096
        %v1303 = vmul.f32 %v731, %v1103
        %v1304 = vmul.f32 %v731, %v1110
        %v1305 = vmul.f32 %v731, %v1117
        %v1306 = vmul.f32 %v731, %v1124
        %v1307 = vmul.f32 %v731, %v1131
        %v1308 = vmul.f32 %v731, %v1138
        %v1309 = vmul.f32 %v731, %v1145
        %v1310 = vmul.f32 %v731, %v1152
        %v1311 = vmul.f32 %v731, %v1159
        %v1312 = vmul.f32 %v731, %v1166
        %v1313 = vmul.f32 %v731, %v1173
        %v1314 = vmul.f32 %v731, %v1180
        %v1315 = vmul.f32 %v731, %v1187
        %1380 = vset.pattern.permute.xlu0 0
        %1381 = vperm.xlu0 %1380, %v1252
        %v1382 = vpop.permute.xlu0 %1381
        %1383 = vset.pattern.permute.xlu0 0
        %1384 = vperm.xlu0 %1383, %v1253
        %v1385 = vpop.permute.xlu0 %1384
        %1386 = vset.pattern.permute.xlu0 0
        %1387 = vperm.xlu0 %1386, %v1254
        %v1388 = vpop.permute.xlu0 %1387
        %1389 = vset.pattern.permute.xlu0 0
        %1390 = vperm.xlu0 %1389, %v1255
        %v1391 = vpop.permute.xlu0 %1390
        %1392 = vset.pattern.permute.xlu0 0
        %1393 = vperm.xlu0 %1392, %v1256
        %v1394 = vpop.permute.xlu0 %1393
        %1395 = vset.pattern.permute.xlu0 0
        %1396 = vperm.xlu0 %1395, %v1257
        %v1397 = vpop.permute.xlu0 %1396
        %1398 = vset.pattern.permute.xlu0 0
        %1399 = vperm.xlu0 %1398, %v1258
        %v1400 = vpop.permute.xlu0 %1399
        %1401 = vset.pattern.permute.xlu0 0
        %1402 = vperm.xlu0 %1401, %v1259
        %v1403 = vpop.permute.xlu0 %1402
        %1404 = vset.pattern.permute.xlu0 0
        %1405 = vperm.xlu0 %1404, %v1260
        %v1406 = vpop.permute.xlu0 %1405
        %1407 = vset.pattern.permute.xlu0 0
        %1408 = vperm.xlu0 %1407, %v1261
        %v1409 = vpop.permute.xlu0 %1408
        %1410 = vset.pattern.permute.xlu0 0
        %1411 = vperm.xlu0 %1410, %v1262
        %v1412 = vpop.permute.xlu0 %1411
        %1413 = vset.pattern.permute.xlu0 0
        %1414 = vperm.xlu0 %1413, %v1263
        %v1415 = vpop.permute.xlu0 %1414
        %1416 = vset.pattern.permute.xlu0 0
        %1417 = vperm.xlu0 %1416, %v1264
        %v1418 = vpop.permute.xlu0 %1417
        %1419 = vset.pattern.permute.xlu0 0
        %1420 = vperm.xlu0 %1419, %v1265
        %v1421 = vpop.permute.xlu0 %1420
        %1422 = vset.pattern.permute.xlu0 0
        %1423 = vperm.xlu0 %1422, %v1266
        %v1424 = vpop.permute.xlu0 %1423
        %1425 = vset.pattern.permute.xlu0 0
        %1426 = vperm.xlu0 %1425, %v1267
        %v1427 = vpop.permute.xlu0 %1426
        %1428 = vset.pattern.permute.xlu0 0
        %1429 = vperm.xlu0 %1428, %v1268
        %v1430 = vpop.permute.xlu0 %1429
        %1431 = vset.pattern.permute.xlu0 0
        %1432 = vperm.xlu0 %1431, %v1269
        %v1433 = vpop.permute.xlu0 %1432
        %1434 = vset.pattern.permute.xlu0 0
        %1435 = vperm.xlu0 %1434, %v1270
        %v1436 = vpop.permute.xlu0 %1435
        %1437 = vset.pattern.permute.xlu0 0
        %1438 = vperm.xlu0 %1437, %v1271
        %v1439 = vpop.permute.xlu0 %1438
        %1440 = vset.pattern.permute.xlu0 0
        %1441 = vperm.xlu0 %1440, %v1272
        %v1442 = vpop.permute.xlu0 %1441
        %1443 = vset.pattern.permute.xlu0 0
        %1444 = vperm.xlu0 %1443, %v1273
        %v1445 = vpop.permute.xlu0 %1444
        %1446 = vset.pattern.permute.xlu0 0
        %1447 = vperm.xlu0 %1446, %v1274
        %v1448 = vpop.permute.xlu0 %1447
        %1449 = vset.pattern.permute.xlu0 0
        %1450 = vperm.xlu0 %1449, %v1275
        %v1451 = vpop.permute.xlu0 %1450
        %1452 = vset.pattern.permute.xlu0 0
        %1453 = vperm.xlu0 %1452, %v1276
        %v1454 = vpop.permute.xlu0 %1453
        %1455 = vset.pattern.permute.xlu0 0
        %1456 = vperm.xlu0 %1455, %v1277
        %v1457 = vpop.permute.xlu0 %1456
        %1458 = vset.pattern.permute.xlu0 0
        %1459 = vperm.xlu0 %1458, %v1278
        %v1460 = vpop.permute.xlu0 %1459
        %1461 = vset.pattern.permute.xlu0 0
        %1462 = vperm.xlu0 %1461, %v1279
        %v1463 = vpop.permute.xlu0 %1462
        %1464 = vset.pattern.permute.xlu0 0
        %1465 = vperm.xlu0 %1464, %v1280
        %v1466 = vpop.permute.xlu0 %1465
        %1467 = vset.pattern.permute.xlu0 0
        %1468 = vperm.xlu0 %1467, %v1281
        %v1469 = vpop.permute.xlu0 %1468
        %1470 = vset.pattern.permute.xlu0 0
        %1471 = vperm.xlu0 %1470, %v1282
        %v1472 = vpop.permute.xlu0 %1471
        %1473 = vset.pattern.permute.xlu0 0
        %1474 = vperm.xlu0 %1473, %v1283
        %v1475 = vpop.permute.xlu0 %1474
        %1476 = vset.pattern.permute.xlu0 0
        %1477 = vperm.xlu0 %1476, %v1284
        %v1478 = vpop.permute.xlu0 %1477
        %1479 = vset.pattern.permute.xlu0 0
        %1480 = vperm.xlu0 %1479, %v1285
        %v1481 = vpop.permute.xlu0 %1480
        %1482 = vset.pattern.permute.xlu0 0
        %1483 = vperm.xlu0 %1482, %v1286
        %v1484 = vpop.permute.xlu0 %1483
        %1485 = vset.pattern.permute.xlu0 0
        %1486 = vperm.xlu0 %1485, %v1287
        %v1487 = vpop.permute.xlu0 %1486
        %1488 = vset.pattern.permute.xlu0 0
        %1489 = vperm.xlu0 %1488, %v1288
        %v1490 = vpop.permute.xlu0 %1489
        %1491 = vset.pattern.permute.xlu0 0
        %1492 = vperm.xlu0 %1491, %v1289
        %v1493 = vpop.permute.xlu0 %1492
        %1494 = vset.pattern.permute.xlu0 0
        %1495 = vperm.xlu0 %1494, %v1290
        %v1496 = vpop.permute.xlu0 %1495
        %1497 = vset.pattern.permute.xlu0 0
        %1498 = vperm.xlu0 %1497, %v1291
        %v1499 = vpop.permute.xlu0 %1498
        %1500 = vset.pattern.permute.xlu0 0
        %1501 = vperm.xlu0 %1500, %v1292
        %v1502 = vpop.permute.xlu0 %1501
        %1503 = vset.pattern.permute.xlu0 0
        %1504 = vperm.xlu0 %1503, %v1293
        %v1505 = vpop.permute.xlu0 %1504
        %1506 = vset.pattern.permute.xlu0 0
        %1507 = vperm.xlu0 %1506, %v1294
        %v1508 = vpop.permute.xlu0 %1507
        %1509 = vset.pattern.permute.xlu0 0
        %1510 = vperm.xlu0 %1509, %v1295
        %v1511 = vpop.permute.xlu0 %1510
        %1512 = vset.pattern.permute.xlu0 0
        %1513 = vperm.xlu0 %1512, %v1296
        %v1514 = vpop.permute.xlu0 %1513
        %1515 = vset.pattern.permute.xlu0 0
        %1516 = vperm.xlu0 %1515, %v1297
        %v1517 = vpop.permute.xlu0 %1516
        %1518 = vset.pattern.permute.xlu0 0
        %1519 = vperm.xlu0 %1518, %v1298
        %v1520 = vpop.permute.xlu0 %1519
        %1521 = vset.pattern.permute.xlu0 0
        %1522 = vperm.xlu0 %1521, %v1299
        %v1523 = vpop.permute.xlu0 %1522
        %1524 = vset.pattern.permute.xlu0 0
        %1525 = vperm.xlu0 %1524, %v1300
        %v1526 = vpop.permute.xlu0 %1525
        %1527 = vset.pattern.permute.xlu0 0
        %1528 = vperm.xlu0 %1527, %v1301
        %v1529 = vpop.permute.xlu0 %1528
        %1530 = vset.pattern.permute.xlu0 0
        %1531 = vperm.xlu0 %1530, %v1302
        %v1532 = vpop.permute.xlu0 %1531
        %1533 = vset.pattern.permute.xlu0 0
        %1534 = vperm.xlu0 %1533, %v1303
        %v1535 = vpop.permute.xlu0 %1534
        %1536 = vset.pattern.permute.xlu0 0
        %1537 = vperm.xlu0 %1536, %v1304
        %v1538 = vpop.permute.xlu0 %1537
        %1539 = vset.pattern.permute.xlu0 0
        %1540 = vperm.xlu0 %1539, %v1305
        %v1541 = vpop.permute.xlu0 %1540
        %1542 = vset.pattern.permute.xlu0 0
        %1543 = vperm.xlu0 %1542, %v1306
        %v1544 = vpop.permute.xlu0 %1543
        %1545 = vset.pattern.permute.xlu0 0
        %1546 = vperm.xlu0 %1545, %v1307
        %v1547 = vpop.permute.xlu0 %1546
        %1548 = vset.pattern.permute.xlu0 0
        %1549 = vperm.xlu0 %1548, %v1308
        %v1550 = vpop.permute.xlu0 %1549
        %1551 = vset.pattern.permute.xlu0 0
        %1552 = vperm.xlu0 %1551, %v1309
        %v1553 = vpop.permute.xlu0 %1552
        %1554 = vset.pattern.permute.xlu0 0
        %1555 = vperm.xlu0 %1554, %v1310
        %v1556 = vpop.permute.xlu0 %1555
        %1557 = vset.pattern.permute.xlu0 0
        %1558 = vperm.xlu0 %1557, %v1311
        %v1559 = vpop.permute.xlu0 %1558
        %1560 = vset.pattern.permute.xlu0 0
        %1561 = vperm.xlu0 %1560, %v1312
        %v1562 = vpop.permute.xlu0 %1561
        %1563 = vset.pattern.permute.xlu0 0
        %1564 = vperm.xlu0 %1563, %v1313
        %v1565 = vpop.permute.xlu0 %1564
        %1566 = vset.pattern.permute.xlu0 0
        %1567 = vperm.xlu0 %1566, %v1314
        %v1568 = vpop.permute.xlu0 %1567
        %1569 = vset.pattern.permute.xlu0 0
        %1570 = vperm.xlu0 %1569, %v1315
        %v1571 = vpop.permute.xlu0 %1570
        %v1572 = vperm.slane %v1382, %v645
        %v1573 = vperm.slane %v1385, %v645
        %v1574 = vperm.slane %v1388, %v645
        %v1575 = vperm.slane %v1391, %v645
        %v1576 = vperm.slane %v1394, %v645
        %v1577 = vperm.slane %v1397, %v645
        %v1578 = vperm.slane %v1400, %v645
        %v1579 = vperm.slane %v1403, %v645
        %v1580 = vperm.slane %v1406, %v645
        %v1581 = vperm.slane %v1409, %v645
        %v1582 = vperm.slane %v1412, %v645
        %v1583 = vperm.slane %v1415, %v645
        %v1584 = vperm.slane %v1418, %v645
        %v1585 = vperm.slane %v1421, %v645
        %v1586 = vperm.slane %v1424, %v645
        %v1587 = vperm.slane %v1427, %v645
        %v1588 = vperm.slane %v1430, %v645
        %v1589 = vperm.slane %v1433, %v645
        %v1590 = vperm.slane %v1436, %v645
        %v1591 = vperm.slane %v1439, %v645
        %v1592 = vperm.slane %v1442, %v645
        %v1593 = vperm.slane %v1445, %v645
        %v1594 = vperm.slane %v1448, %v645
        %v1595 = vperm.slane %v1451, %v645
        %v1596 = vperm.slane %v1454, %v645
        %v1597 = vperm.slane %v1457, %v645
        %v1598 = vperm.slane %v1460, %v645
        %v1599 = vperm.slane %v1463, %v645
        %v1600 = vperm.slane %v1466, %v645
        %v1601 = vperm.slane %v1469, %v645
        %v1602 = vperm.slane %v1472, %v645
        %v1603 = vperm.slane %v1475, %v645
        %v1604 = vperm.slane %v1478, %v645
        %v1605 = vperm.slane %v1481, %v645
        %v1606 = vperm.slane %v1484, %v645
        %v1607 = vperm.slane %v1487, %v645
        %v1608 = vperm.slane %v1490, %v645
        %v1609 = vperm.slane %v1493, %v645
        %v1610 = vperm.slane %v1496, %v645
        %v1611 = vperm.slane %v1499, %v645
        %v1612 = vperm.slane %v1502, %v645
        %v1613 = vperm.slane %v1505, %v645
        %v1614 = vperm.slane %v1508, %v645
        %v1615 = vperm.slane %v1511, %v645
        %v1616 = vperm.slane %v1514, %v645
        %v1617 = vperm.slane %v1517, %v645
        %v1618 = vperm.slane %v1520, %v645
        %v1619 = vperm.slane %v1523, %v645
        %v1620 = vperm.slane %v1526, %v645
        %v1621 = vperm.slane %v1529, %v645
        %v1622 = vperm.slane %v1532, %v645
        %v1623 = vperm.slane %v1535, %v645
        %v1624 = vperm.slane %v1538, %v645
        %v1625 = vperm.slane %v1541, %v645
        %v1626 = vperm.slane %v1544, %v645
        %v1627 = vperm.slane %v1547, %v645
        %v1628 = vperm.slane %v1550, %v645
        %v1629 = vperm.slane %v1553, %v645
        %v1630 = vperm.slane %v1556, %v645
        %v1631 = vperm.slane %v1559, %v645
        %v1632 = vperm.slane %v1562, %v645
        %v1633 = vperm.slane %v1565, %v645
        %v1634 = vperm.slane %v1568, %v645
        %v1635 = vperm.slane %v1571, %v645
        %v1636 = vsel %vm720, %v1573, %v1572
        %v1637 = vsel %vm722, %v1574, %v1636
        %v1638 = vsel %vm724, %v1575, %v1637
        %vm1639 = vcmask 1044484
        %v1640 = vsel %vm1639, %v1576, %v1638
        %vm1641 = vcmask 1045509
        %v1642 = vsel %vm1641, %v1577, %v1640
        %vm1643 = vcmask 1046534
        %v1644 = vsel %vm1643, %v1578, %v1642
        %vm1645 = vcmask 1047559
        %v1646 = vsel %vm1645, %v1579, %v1644
        %v1647 = vsel %vm720, %v1581, %v1580
        %v1648 = vsel %vm722, %v1582, %v1647
        %v1649 = vsel %vm724, %v1583, %v1648
        %v1650 = vsel %vm1639, %v1584, %v1649
        %v1651 = vsel %vm1641, %v1585, %v1650
        %v1652 = vsel %vm1643, %v1586, %v1651
        %v1653 = vsel %vm1645, %v1587, %v1652
        %v1654 = vsel %vm720, %v1589, %v1588
        %v1655 = vsel %vm722, %v1590, %v1654
        %v1656 = vsel %vm724, %v1591, %v1655
        %v1657 = vsel %vm1639, %v1592, %v1656
        %v1658 = vsel %vm1641, %v1593, %v1657
        %v1659 = vsel %vm1643, %v1594, %v1658
        %v1660 = vsel %vm1645, %v1595, %v1659
        %v1661 = vsel %vm720, %v1597, %v1596
        %v1662 = vsel %vm722, %v1598, %v1661
        %v1663 = vsel %vm724, %v1599, %v1662
        %v1664 = vsel %vm1639, %v1600, %v1663
        %v1665 = vsel %vm1641, %v1601, %v1664
        %v1666 = vsel %vm1643, %v1602, %v1665
        %v1667 = vsel %vm1645, %v1603, %v1666
        %v1668 = vsel %vm720, %v1605, %v1604
        %v1669 = vsel %vm722, %v1606, %v1668
        %v1670 = vsel %vm724, %v1607, %v1669
        %v1671 = vsel %vm1639, %v1608, %v1670
        %v1672 = vsel %vm1641, %v1609, %v1671
        %v1673 = vsel %vm1643, %v1610, %v1672
        %v1674 = vsel %vm1645, %v1611, %v1673
        %v1675 = vsel %vm720, %v1613, %v1612
        %v1676 = vsel %vm722, %v1614, %v1675
        %v1677 = vsel %vm724, %v1615, %v1676
        %v1678 = vsel %vm1639, %v1616, %v1677
        %v1679 = vsel %vm1641, %v1617, %v1678
        %v1680 = vsel %vm1643, %v1618, %v1679
        %v1681 = vsel %vm1645, %v1619, %v1680
        %v1682 = vsel %vm720, %v1621, %v1620
        %v1683 = vsel %vm722, %v1622, %v1682
        %v1684 = vsel %vm724, %v1623, %v1683
        %v1685 = vsel %vm1639, %v1624, %v1684
        %v1686 = vsel %vm1641, %v1625, %v1685
        %v1687 = vsel %vm1643, %v1626, %v1686
        %v1688 = vsel %vm1645, %v1627, %v1687
        %v1689 = vsel %vm720, %v1629, %v1628
        %v1690 = vsel %vm722, %v1630, %v1689
        %v1691 = vsel %vm724, %v1631, %v1690
        %v1692 = vsel %vm1639, %v1632, %v1691
        %v1693 = vsel %vm1641, %v1633, %v1692
        %v1694 = vsel %vm1643, %v1634, %v1693
        %v1695 = vsel %vm1645, %v1635, %v1694
        %vm1704 = vcmask 31744
        %v1705 = vsel %vm1704, %v1646, 0.0
        %1706 = vadd.xlane.f32.xlu0 %v1705
        %v1707 = vpop.xlane.xlu0 %1706
        %v1708 = vsel %vm1704, %v1653, 0.0
        %1709 = vadd.xlane.f32.xlu0 %v1708
        %v1710 = vpop.xlane.xlu0 %1709
        %v1711 = vsel %vm1704, %v1660, 0.0
        %1712 = vadd.xlane.f32.xlu0 %v1711
        %v1713 = vpop.xlane.xlu0 %1712
        %v1714 = vsel %vm1704, %v1667, 0.0
        %1715 = vadd.xlane.f32.xlu0 %v1714
        %v1716 = vpop.xlane.xlu0 %1715
        %v1717 = vsel %vm1704, %v1674, 0.0
        %1718 = vadd.xlane.f32.xlu0 %v1717
        %v1719 = vpop.xlane.xlu0 %1718
        %v1720 = vsel %vm1704, %v1681, 0.0
        %1721 = vadd.xlane.f32.xlu0 %v1720
        %v1722 = vpop.xlane.xlu0 %1721
        %v1723 = vsel %vm1704, %v1688, 0.0
        %1724 = vadd.xlane.f32.xlu0 %v1723
        %v1725 = vpop.xlane.xlu0 %1724
        %v1726 = vsel %vm1704, %v1695, 0.0
        %1727 = vadd.xlane.f32.xlu0 %v1726
        %v1728 = vpop.xlane.xlu0 %1727
        %v1729 = vxor.u32 %v1707, 2147483648
        %v1730 = vxor.u32 %v1710, 2147483648
        %v1731 = vxor.u32 %v1713, 2147483648
        %v1732 = vxor.u32 %v1716, 2147483648
        %v1733 = vxor.u32 %v1719, 2147483648
        %v1734 = vxor.u32 %v1722, 2147483648
        %v1735 = vxor.u32 %v1725, 2147483648
        %v1736 = vxor.u32 %v1728, 2147483648
        %v1737 = vmul.f32 %v1729, 1.442695
        %v1738 = vpow.pop %v1737
        %v1739 = vmul.f32 %v1730, 1.442695
        %v1740 = vpow.pop %v1739
        %v1741 = vmul.f32 %v1731, 1.442695
        %v1742 = vpow.pop %v1741
        %v1743 = vmul.f32 %v1732, 1.442695
        %v1744 = vpow.pop %v1743
        %v1745 = vmul.f32 %v1733, 1.442695
        %v1746 = vpow.pop %v1745
        %v1747 = vmul.f32 %v1734, 1.442695
        %v1748 = vpow.pop %v1747
        %v1749 = vmul.f32 %v1735, 1.442695
        %v1750 = vpow.pop %v1749
        %v1751 = vmul.f32 %v1736, 1.442695
        %v1752 = vpow.pop %v1751
        %v1753 = vadd.f32 %v1738, 1.0
        %v1754 = vadd.f32 %v1740, 1.0
        %v1755 = vadd.f32 %v1742, 1.0
        %v1756 = vadd.f32 %v1744, 1.0
        %v1757 = vadd.f32 %v1746, 1.0
        %v1758 = vadd.f32 %v1748, 1.0
        %v1759 = vadd.f32 %v1750, 1.0
        %v1760 = vadd.f32 %v1752, 1.0
        %v1761 = vrcp.pop %v1753
        %v1762 = vmul.f32 %v1753, %v1761
        %v1763 = vsub.f32 1.0, %v1762
        %v1764 = vmul.f32 %v1761, %v1763
        %v1765 = vadd.f32 %v1761, %v1764
        %vm1766 = vweird.f32 %v1753
        %vm1767 = vweird.f32 %v1761
        %vm1768 = vmor %vm1766, %vm1767
        %v1769 = vsel %vm1768, %v1761, %v1765
        %v1770 = vand.u32 2147483647, %v1753
        %vm1771 = vcmp.eq.f32.partialorder %v1770, 8.507059e+37
        %v1772 = vand.u32 %v1753, 2147483648
        %v1773 = vor.u32 1.1754944e-38, %v1772
        %v1774 = vsel %vm1771, %v1773, %v1769
        %v1775 = vmul.f32 1.0, %v1774
        %v1776 = vrcp.pop %v1754
        %v1777 = vmul.f32 %v1754, %v1776
        %v1778 = vsub.f32 1.0, %v1777
        %v1779 = vmul.f32 %v1776, %v1778
        %v1780 = vadd.f32 %v1776, %v1779
        %vm1781 = vweird.f32 %v1754
        %vm1782 = vweird.f32 %v1776
        %vm1783 = vmor %vm1781, %vm1782
        %v1784 = vsel %vm1783, %v1776, %v1780
        %v1785 = vand.u32 2147483647, %v1754
        %vm1786 = vcmp.eq.f32.partialorder %v1785, 8.507059e+37
        %v1787 = vand.u32 %v1754, 2147483648
        %v1788 = vor.u32 1.1754944e-38, %v1787
        %v1789 = vsel %vm1786, %v1788, %v1784
        %v1790 = vmul.f32 1.0, %v1789
        %v1791 = vrcp.pop %v1755
        %v1792 = vmul.f32 %v1755, %v1791
        %v1793 = vsub.f32 1.0, %v1792
        %v1794 = vmul.f32 %v1791, %v1793
        %v1795 = vadd.f32 %v1791, %v1794
        %vm1796 = vweird.f32 %v1755
        %vm1797 = vweird.f32 %v1791
        %vm1798 = vmor %vm1796, %vm1797
        %v1799 = vsel %vm1798, %v1791, %v1795
        %v1800 = vand.u32 2147483647, %v1755
        %vm1801 = vcmp.eq.f32.partialorder %v1800, 8.507059e+37
        %v1802 = vand.u32 %v1755, 2147483648
        %v1803 = vor.u32 1.1754944e-38, %v1802
        %v1804 = vsel %vm1801, %v1803, %v1799
        %v1805 = vmul.f32 1.0, %v1804
        %v1806 = vrcp.pop %v1756
        %v1807 = vmul.f32 %v1756, %v1806
        %v1808 = vsub.f32 1.0, %v1807
        %v1809 = vmul.f32 %v1806, %v1808
        %v1810 = vadd.f32 %v1806, %v1809
        %vm1811 = vweird.f32 %v1756
        %vm1812 = vweird.f32 %v1806
        %vm1813 = vmor %vm1811, %vm1812
        %v1814 = vsel %vm1813, %v1806, %v1810
        %v1815 = vand.u32 2147483647, %v1756
        %vm1816 = vcmp.eq.f32.partialorder %v1815, 8.507059e+37
        %v1817 = vand.u32 %v1756, 2147483648
        %v1818 = vor.u32 1.1754944e-38, %v1817
        %v1819 = vsel %vm1816, %v1818, %v1814
        %v1820 = vmul.f32 1.0, %v1819
        %v1821 = vrcp.pop %v1757
        %v1822 = vmul.f32 %v1757, %v1821
        %v1823 = vsub.f32 1.0, %v1822
        %v1824 = vmul.f32 %v1821, %v1823
        %v1825 = vadd.f32 %v1821, %v1824
        %vm1826 = vweird.f32 %v1757
        %vm1827 = vweird.f32 %v1821
        %vm1828 = vmor %vm1826, %vm1827
        %v1829 = vsel %vm1828, %v1821, %v1825
        %v1830 = vand.u32 2147483647, %v1757
        %vm1831 = vcmp.eq.f32.partialorder %v1830, 8.507059e+37
        %v1832 = vand.u32 %v1757, 2147483648
        %v1833 = vor.u32 1.1754944e-38, %v1832
        %v1834 = vsel %vm1831, %v1833, %v1829
        %v1835 = vmul.f32 1.0, %v1834
        %v1836 = vrcp.pop %v1758
        %v1837 = vmul.f32 %v1758, %v1836
        %v1838 = vsub.f32 1.0, %v1837
        %v1839 = vmul.f32 %v1836, %v1838
        %v1840 = vadd.f32 %v1836, %v1839
        %vm1841 = vweird.f32 %v1758
        %vm1842 = vweird.f32 %v1836
        %vm1843 = vmor %vm1841, %vm1842
        %v1844 = vsel %vm1843, %v1836, %v1840
        %v1845 = vand.u32 2147483647, %v1758
        %vm1846 = vcmp.eq.f32.partialorder %v1845, 8.507059e+37
        %v1847 = vand.u32 %v1758, 2147483648
        %v1848 = vor.u32 1.1754944e-38, %v1847
        %v1849 = vsel %vm1846, %v1848, %v1844
        %v1850 = vmul.f32 1.0, %v1849
        %v1851 = vrcp.pop %v1759
        %v1852 = vmul.f32 %v1759, %v1851
        %v1853 = vsub.f32 1.0, %v1852
        %v1854 = vmul.f32 %v1851, %v1853
        %v1855 = vadd.f32 %v1851, %v1854
        %vm1856 = vweird.f32 %v1759
        %vm1857 = vweird.f32 %v1851
        %vm1858 = vmor %vm1856, %vm1857
        %v1859 = vsel %vm1858, %v1851, %v1855
        %v1860 = vand.u32 2147483647, %v1759
        %vm1861 = vcmp.eq.f32.partialorder %v1860, 8.507059e+37
        %v1862 = vand.u32 %v1759, 2147483648
        %v1863 = vor.u32 1.1754944e-38, %v1862
        %v1864 = vsel %vm1861, %v1863, %v1859
        %v1865 = vmul.f32 1.0, %v1864
        %v1866 = vrcp.pop %v1760
        %v1867 = vmul.f32 %v1760, %v1866
        %v1868 = vsub.f32 1.0, %v1867
        %v1869 = vmul.f32 %v1866, %v1868
        %v1870 = vadd.f32 %v1866, %v1869
        %vm1871 = vweird.f32 %v1760
        %vm1872 = vweird.f32 %v1866
        %vm1873 = vmor %vm1871, %vm1872
        %v1874 = vsel %vm1873, %v1866, %v1870
        %v1875 = vand.u32 2147483647, %v1760
        %vm1876 = vcmp.eq.f32.partialorder %v1875, 8.507059e+37
        %v1877 = vand.u32 %v1760, 2147483648
        %v1878 = vor.u32 1.1754944e-38, %v1877
        %v1879 = vsel %vm1876, %v1878, %v1874
        %v1880 = vmul.f32 1.0, %v1879
        %v1881 = vmul.f32 %v191, %v1775
        %v1882 = vmul.f32 %v192, %v1775
        %v1883 = vmul.f32 %v193, %v1790
        %v1884 = vmul.f32 %v194, %v1790
        %v1885 = vmul.f32 %v195, %v1805
        %v1886 = vmul.f32 %v196, %v1805
        %v1887 = vmul.f32 %v197, %v1820
        %v1888 = vmul.f32 %v198, %v1820
        %v1889 = vmul.f32 %v199, %v1835
        %v1890 = vmul.f32 %v200, %v1835
        %v1891 = vmul.f32 %v201, %v1850
        %v1892 = vmul.f32 %v202, %v1850
        %v1893 = vmul.f32 %v203, %v1865
        %v1894 = vmul.f32 %v204, %v1865
        %v1895 = vmul.f32 %v205, %v1880
        %v1896 = vmul.f32 %v206, %v1880
        %1897 = vst [vmem:[%s190] sm:$0xff] %v1881
        %1898 = vst [vmem:[%s190 + $0x8] sm:$0xff] %v1882
        %1899 = vst [vmem:[%s190 + $0x10] sm:$0xff] %v1883
        %1900 = vst [vmem:[%s190 + $0x18] sm:$0xff] %v1884
        %1901 = vst [vmem:[%s190 + $0x20] sm:$0xff] %v1885
        %1902 = vst [vmem:[%s190 + $0x28] sm:$0xff] %v1886
        %1903 = vst [vmem:[%s190 + $0x30] sm:$0xff] %v1887
        %1904 = vst [vmem:[%s190 + $0x38] sm:$0xff] %v1888
        %1905 = vst [vmem:[%s190 + $0x40] sm:$0xff] %v1889
        %1906 = vst [vmem:[%s190 + $0x48] sm:$0xff] %v1890
        %1907 = vst [vmem:[%s190 + $0x50] sm:$0xff] %v1891
        %1908 = vst [vmem:[%s190 + $0x58] sm:$0xff] %v1892
        %1909 = vst [vmem:[%s190 + $0x60] sm:$0xff] %v1893
        %1910 = vst [vmem:[%s190 + $0x68] sm:$0xff] %v1894
        %1911 = vst [vmem:[%s190 + $0x70] sm:$0xff] %v1895
        %1912 = vst [vmem:[%s190 + $0x78] sm:$0xff] %v1896
        %s1913 = sand.u32 %s96, 1
        %s1914 = scalar_lea.sflag [#allocation4], %s1913
        %s1915 = sand.u32 %s96, 1
        %s1916 = smul.addr %s1915, 128
        %s1917 = scalar_lea.vmem [#allocation5], %s1916
        // Predicated region
        $region37: #{tpu_custom_call.1} parent=31 // pred_check
          %p1918 = pneg %p106
        $region38: #{tpu_custom_call.1} parent=31 // pred_check_branch
          %1920 = sbr.rel (%p1918) target = $region40
        $region39: #{tpu_custom_call.1} parent=31 // pred_region
          %1922 = vsyncadd %s1914, 0
          %s1923 = smul.addr %s20, 16
          %s1924 = smul.addr %s1923, 8
          %s1925 = scalar_lea.hbm %s3, %s1924
          %s1926 = sshll.u32 %s1917, 4
          %s1927 = int_to_ptr.vmem [resolvable:$true] %s1926
          %s1928 = sshll.u32 %s1925, 4
          %s1929 = int_to_ptr.hbm [resolvable:$true] %s1928
          %1934 = dma.vmem_to_hbm [thread:$0]  %s1927, 2048, %s1929, %s1914, 256, 256, 16
        $region40: #{tpu_custom_call.1} parent=31 // pred_fallthru
          _
      $region32: #{tpu_custom_call.1} parent=5 // pred_fallthru
        _
      %p1935 = scmp.le.s32.totalorder 2, %s15
      // Predicated region
      $region41: #{tpu_custom_call.1} parent=5 // pred_check
        %p1936 = pneg %p1935
      $region42: #{tpu_custom_call.1} parent=5 // pred_check_branch
        %1938 = sbr.rel (%p1936) target = $region44
      $region43: #{tpu_custom_call.1} parent=5 // pred_region
        %s1939 = ssub.s32 %s15, 2
        // Predicated region
        $region45: #{tpu_custom_call.1} parent=43 // pred_check
          %p1940 = pneg %p112
        $region46: #{tpu_custom_call.1} parent=43 // pred_check_branch
          %1942 = sbr.rel (%p1940) target = $region48
        $region47: #{tpu_custom_call.1} parent=43 // pred_region
          %s1943 = sand.u32 %s97, 1
          %s1944 = scalar_lea.sflag [#allocation4], %s1943
          %s1945 = sand.u32 %s97, 1
          %s1946 = smul.addr %s1945, 128
          %s1947 = scalar_lea.vmem [#allocation5], %s1946
          %1949 = dma.done %s1944, 2048
        $region48: #{tpu_custom_call.1} parent=43 // pred_fallthru
          _
      $region44: #{tpu_custom_call.1} parent=5 // pred_fallthru
        _
    $region6: #{tpu_custom_call.1} parent=1 // loop_footer
      %s19 = sadd.s32 1, %s15
    $region7: #{tpu_custom_call.1} parent=1 // loop_footer_branch
      %14 = sbr.rel target = $region3
    $region8: #{tpu_custom_call.1} parent=1 // loop_exit
      _
    %1950 = vsyncpa [#allocation3], 1
    %s1951 = scalar_lea.sflag [#allocation3], 1
    %1952 = vsyncpa %s1951, 1
    %1953 = vsyncpa [#allocation4], 1
    %s1954 = scalar_lea.sflag [#allocation4], 1
    %1955 = vsyncpa %s1954, 1

</llo_original>
